<compile_context>
chip_gen: v7x
topology: tpu7x:2x2x1
jax: 0.10.0
libtpu: 0.0.40
codegen_flags: <defaults>
</compile_context>

<pallas_src>
import functools

import jax
import jax.numpy as jnp
from jax.experimental import pallas as pl
from jax.experimental.pallas import tpu as pltpu

_BN_EPS = 1e-5
_NEG_SLOPE = 0.2
_VMEM_LIMIT = 32 * 1024 * 1024  # explicit scoped-VMEM request (safe on v5e/v6e/v7x)


def _round_up(x, m):
    return (x + m - 1) // m * m


# ----------------------------------------------------------------------------
# Phase 1: conv-as-matmul (bf16 MXU, f32 accumulation) + per-channel sum /
#          sum-of-squares accumulated across the M grid axis.
# ----------------------------------------------------------------------------
def conv_stats_kernel(patch_ref, w_ref, conv_ref, stats_ref):
    i = pl.program_id(0)

    conv = jnp.dot(patch_ref[...], w_ref[...],
                   preferred_element_type=jnp.float32)      # (tm, Cout) f32
    conv_ref[...] = conv

    cout = conv.shape[1]
    s = jnp.sum(conv, axis=0, keepdims=True)                 # (1, Cout)  XLU reduce
    sq = jnp.sum(conv * conv, axis=0, keepdims=True)         # (1, Cout)
    upd = jnp.concatenate(
        [s, sq, jnp.zeros((6, cout), jnp.float32)], axis=0)  # (8, Cout)

    @pl.when(i == 0)
    def _init():
        stats_ref[...] = upd

    @pl.when(i > 0)
    def _acc():
        stats_ref[...] = stats_ref[...] + upd


def conv_stats_call(patches_bf16, w2d_bf16, *, tm):
    m_pad, k = patches_bf16.shape
    cout = w2d_bf16.shape[1]
    grid = (m_pad // tm,)

    flops = 2 * m_pad * k * cout
    bytes_accessed = (patches_bf16.size * 2 + w2d_bf16.size * 2
                      + m_pad * cout * 4 + 8 * cout * 4)

    return pl.pallas_call(
        conv_stats_kernel,
        out_shape=(jax.ShapeDtypeStruct((m_pad, cout), jnp.float32),
                   jax.ShapeDtypeStruct((8, cout), jnp.float32)),
        grid_spec=pltpu.PrefetchScalarGridSpec(
            num_scalar_prefetch=0,
            grid=grid,
            in_specs=[pl.BlockSpec((tm, k), lambda i: (i, 0)),       # patch tile
                      pl.BlockSpec((k, cout), lambda i: (0, 0))],    # weights (resident)
            out_specs=[pl.BlockSpec((tm, cout), lambda i: (i, 0)),   # conv tiles
                       pl.BlockSpec((8, cout), lambda i: (0, 0))]),  # stats accumulator
        compiler_params=pltpu.CompilerParams(
            dimension_semantics=("arbitrary",),   # stats block is resident accumulator
            vmem_limit_bytes=_VMEM_LIMIT),
        cost_estimate=pl.CostEstimate(flops=flops, transcendentals=0,
                                      bytes_accessed=bytes_accessed),
    )(patches_bf16, w2d_bf16)


# ----------------------------------------------------------------------------
# Phase 2: BatchNorm(batch stats) apply + LeakyReLU(0.2), lane-dense (tm, 128).
# ----------------------------------------------------------------------------
def bn_act_kernel(inv_m, conv_ref, stats_ref, gamma_ref, beta_ref, out_ref):
    mean = stats_ref[0:1, :] * inv_m                              # (1, Cout)
    var = jnp.maximum(stats_ref[1:2, :] * inv_m - mean * mean, 0.0)  # biased var
    inv_std = jax.lax.rsqrt(var + _BN_EPS)
    scale = gamma_ref[...] * inv_std                              # (1, Cout)
    shift = beta_ref[...] - mean * scale                          # (1, Cout)

    y = conv_ref[...] * scale + shift                             # one FMA / element
    out_ref[...] = jnp.where(y >= 0.0, y, _NEG_SLOPE * y)         # one select / element


def bn_act_call(conv2d, stats, gamma2d, beta2d, m_real, *, tm):
    m_pad, cout = conv2d.shape
    grid = (m_pad // tm,)
    kernel = functools.partial(bn_act_kernel, 1.0 / float(m_real))
    return pl.pallas_call(
        kernel,
        out_shape=jax.ShapeDtypeStruct((m_pad, cout), jnp.float32),
        grid_spec=pltpu.PrefetchScalarGridSpec(
            num_scalar_prefetch=0,
            grid=grid,
            in_specs=[pl.BlockSpec((tm, cout), lambda i: (i, 0)),
                      pl.BlockSpec((8, cout), lambda i: (0, 0)),
                      pl.BlockSpec((1, cout), lambda i: (0, 0)),
                      pl.BlockSpec((1, cout), lambda i: (0, 0))],
            out_specs=pl.BlockSpec((tm, cout), lambda i: (i, 0))),
        compiler_params=pltpu.CompilerParams(
            dimension_semantics=("parallel",),    # shards across TCs on v7x
            vmem_limit_bytes=_VMEM_LIMIT),
    )(conv2d, stats, gamma2d, beta2d)


# ----------------------------------------------------------------------------
# JAX glue
# ----------------------------------------------------------------------------
def tf_same_pad_and_im2col(x, k=3, stride=2):
    """x: (B, C, H, W) NCHW. TF-'SAME' padding (extra on bottom/right, matching
    the custom Conv2d in Unet.py), then k x k patch extraction with stride.
    Returns (patches (B*OH*OW, C*k*k), OH, OW)."""
    B, C, H, W = x.shape
    OH = -(-H // stride)
    OW = -(-W // stride)
    pad_h = max(0, (OH - 1) * stride + k - H)
    pad_w = max(0, (OW - 1) * stride + k - W)
    ph0, ph1 = pad_h // 2, pad_h - pad_h // 2
    pw0, pw1 = pad_w // 2, pad_w - pad_w // 2
    xp = jnp.pad(x, ((0, 0), (0, 0), (ph0, ph1), (pw0, pw1)))

    cols = []
    for kh in range(k):
        for kw in range(k):
            cols.append(
                xp[:, :, kh:kh + stride * OH:stride, kw:kw + stride * OW:stride])
    patches = jnp.stack(cols, axis=2)                  # (B, C, k*k, OH, OW)
    patches = patches.transpose(0, 3, 4, 1, 2)         # (B, OH, OW, C, k*k)
    patches = patches.reshape(B * OH * OW, C * k * k)  # matches (Cin,Kh,Kw) flatten
    return patches, OH, OW


def group5_forward(x, conv_w, conv_b, bn_gamma, bn_beta, *, tm=512):
    """x: (B, 128, H, W) NCHW f32 -> (B, 128, ceil(H/2), ceil(W/2)) NCHW f32.

    conv_b is accepted for interface parity but intentionally unused: the
    BatchNorm batch-mean subtraction cancels a per-channel conv bias exactly.
    """
    del conv_b
    B = x.shape[0]
    cout, cin, kh, kw = conv_w.shape

    patches, OH, OW = tf_same_pad_and_im2col(x, k=kh, stride=2)
    M, K = patches.shape

    # Tile / pad M so every block is (8, 128)-aligned; zero rows add 0 to stats.
    tm = min(tm, _round_up(M, 8))
    m_pad = _round_up(M, tm)
    if m_pad != M:
        patches = jnp.pad(patches, ((0, m_pad - M), (0, 0)))

    # bf16 MXU feed (halves DMA bytes for the dominant operand).
    patches_bf16 = patches.astype(jnp.bfloat16)
    w2d_bf16 = conv_w.reshape(cout, cin * kh * kw).T.astype(jnp.bfloat16)

    conv2d, stats = conv_stats_call(patches_bf16, w2d_bf16, tm=tm)

    gamma2d = bn_gamma.reshape(1, cout).astype(jnp.float32)
    beta2d = bn_beta.reshape(1, cout).astype(jnp.float32)
    out2d = bn_act_call(conv2d, stats, gamma2d, beta2d, M, tm=tm)

    out2d = out2d[:M]
    out = out2d.reshape(B, OH, OW, cout).transpose(0, 3, 1, 2)  # back to NCHW
    return out


# ----------------------------------------------------------------------------
# main
# ----------------------------------------------------------------------------
if __name__ == "__main__":
    key = jax.random.PRNGKey(0)
    k_x, k_w, k_b = jax.random.split(key, 3)

    B, CIN, H, W = 2, 128, 16, 16
    COUT, K = 128, 3

    x = jax.random.normal(k_x, (B, CIN, H, W), dtype=jnp.float32)

    # Deterministic parameter init (Conv2d(128->128, k=3, s=2); BN(128) fresh).
    fan_in = CIN * K * K
    bound = 1.0 / (fan_in ** 0.5)
    conv_w = jax.random.uniform(k_w, (COUT, CIN, K, K), jnp.float32, -bound, bound)
    conv_b = jax.random.uniform(k_b, (COUT,), jnp.float32, -bound, bound)
    bn_gamma = jnp.ones((COUT,), jnp.float32)
    bn_beta = jnp.zeros((COUT,), jnp.float32)

    out = group5_forward(x, conv_w, conv_b, bn_gamma, bn_beta)
    out = jax.block_until_ready(out)
    assert out.shape == (B, COUT, 8, 8), out.shape
    print("KERNEL_OK")
</pallas_src>

<mosaic_0001>
module attributes {stable_mosaic.version = 11 : i64} {
  func.func @conv_stats_kernel(%arg0: i32, %arg1: memref<128x1152xbf16, #tpu.memory_space<vmem>>, %arg2: memref<1152x128xbf16, #tpu.memory_space<vmem>>, %arg3: memref<128x128xf32, #tpu.memory_space<vmem>>, %arg4: memref<8x128xf32, #tpu.memory_space<vmem>>) attributes {dimension_semantics = [#tpu.dimension_semantics<arbitrary>], iteration_bounds = array<i64: 1>, scalar_prefetch = 0 : i64, scratch_operands = 0 : i64, tpu.core_type = #tpu.core_type<tc>, window_params = [{transform_indices = @transform_0, window_bounds = array<i64: 128, 1152>}, {pipeline_mode = #tpu.pipeline_mode<synchronous>, transform_indices = @transform_1, window_bounds = array<i64: 1152, 128>}, {transform_indices = @transform_2, window_bounds = array<i64: 128, 128>}, {pipeline_mode = #tpu.pipeline_mode<synchronous>, transform_indices = @transform_3, window_bounds = array<i64: 8, 128>}]} {
    %c0 = arith.constant 0 : index
    %c0_0 = arith.constant 0 : index
    %0 = vector.load %arg1[%c0, %c0_0] : memref<128x1152xbf16, #tpu.memory_space<vmem>>, vector<128x1152xbf16>
    %c0_1 = arith.constant 0 : index
    %c0_2 = arith.constant 0 : index
    %1 = vector.load %arg2[%c0_1, %c0_2] : memref<1152x128xbf16, #tpu.memory_space<vmem>>, vector<1152x128xbf16>
    %cst = arith.constant dense<0.000000e+00> : vector<128x128xf32>
    %2 = tpu.matmul %0, %1, %cst {dimension_numbers = #tpu.dot_dimension_numbers<[1], [0], [0], [1], [0, 0, 1, 1], [], []>} : vector<128x1152xbf16>, vector<1152x128xbf16>, vector<128x128xf32> -> vector<128x128xf32>
    %c0_3 = arith.constant 0 : index
    %c0_4 = arith.constant 0 : index
    %3 = vector.load %arg3[%c0_3, %c0_4] : memref<128x128xf32, #tpu.memory_space<vmem>>, vector<128x128xf32>
    tpu.vector_store %arg3[%c0_3, %c0_4], %2 {strides = array<i32>} : memref<128x128xf32, #tpu.memory_space<vmem>>, vector<128x128xf32>,
    %cst_5 = arith.constant dense<0.000000e+00> : vector<128xf32>
    %4 = vector.multi_reduction <add>, %2, %cst_5 [0] : vector<128x128xf32> to vector<128xf32>
    %5 = vector.shape_cast %4 : vector<128xf32> to vector<1x128xf32>
    %6 = arith.mulf %2, %2 : vector<128x128xf32>
    %cst_6 = arith.constant dense<0.000000e+00> : vector<128xf32>
    %7 = vector.multi_reduction <add>, %6, %cst_6 [0] : vector<128x128xf32> to vector<128xf32>
    %8 = vector.shape_cast %7 : vector<128xf32> to vector<1x128xf32>
    %cst_7 = arith.constant 0.000000e+00 : f32
    %9 = vector.broadcast %cst_7 : f32 to vector<6x128xf32>
    %10 = tpu.concatenate %5, %8, %9 in 0 : vector<1x128xf32>, vector<1x128xf32>, vector<6x128xf32> -> vector<8x128xf32>
    %c0_i32 = arith.constant 0 : i32
    %11 = arith.cmpi eq, %arg0, %c0_i32 : i32
    %12 = arith.extui %11 : i1 to i32
    %c0_i32_8 = arith.constant 0 : i32
    %13 = arith.cmpi ne, %12, %c0_i32_8 : i32
    scf.if %13 {
      %c0_11 = arith.constant 0 : index
      %c0_12 = arith.constant 0 : index
      %17 = vector.load %arg4[%c0_11, %c0_12] : memref<8x128xf32, #tpu.memory_space<vmem>>, vector<8x128xf32>
      tpu.vector_store %arg4[%c0_11, %c0_12], %10 {strides = array<i32>} : memref<8x128xf32, #tpu.memory_space<vmem>>, vector<8x128xf32>,
    } else {
    }
    %c0_i32_9 = arith.constant 0 : i32
    %14 = arith.cmpi sgt, %arg0, %c0_i32_9 : i32
    %15 = arith.extui %14 : i1 to i32
    %c0_i32_10 = arith.constant 0 : i32
    %16 = arith.cmpi ne, %15, %c0_i32_10 : i32
    scf.if %16 {
      %c0_11 = arith.constant 0 : index
      %c0_12 = arith.constant 0 : index
      %17 = vector.load %arg4[%c0_11, %c0_12] : memref<8x128xf32, #tpu.memory_space<vmem>>, vector<8x128xf32>
      %18 = arith.addf %17, %10 : vector<8x128xf32>
      %c0_13 = arith.constant 0 : index
      %c0_14 = arith.constant 0 : index
      %19 = vector.load %arg4[%c0_13, %c0_14] : memref<8x128xf32, #tpu.memory_space<vmem>>, vector<8x128xf32>
      tpu.vector_store %arg4[%c0_13, %c0_14], %18 {strides = array<i32>} : memref<8x128xf32, #tpu.memory_space<vmem>>, vector<8x128xf32>,
    } else {
    }
    return
  }
  func.func @transform_0(%arg0: i32) -> (i32, i32) {
    %c0_i32 = arith.constant 0 : i32
    %c0_i32_0 = arith.constant 0 : i32
    return %arg0, %c0_i32 : i32, i32
  }
  func.func @transform_1(%arg0: i32) -> (i32, i32) {
    %c0_i32 = arith.constant 0 : i32
    %c0_i32_0 = arith.constant 0 : i32
    %c0_i32_1 = arith.constant 0 : i32
    return %c0_i32, %c0_i32_0 : i32, i32
  }
  func.func @transform_2(%arg0: i32) -> (i32, i32) {
    %c0_i32 = arith.constant 0 : i32
    %c0_i32_0 = arith.constant 0 : i32
    return %arg0, %c0_i32 : i32, i32
  }
  func.func @transform_3(%arg0: i32) -> (i32, i32) {
    %c0_i32 = arith.constant 0 : i32
    %c0_i32_0 = arith.constant 0 : i32
    %c0_i32_1 = arith.constant 0 : i32
    return %c0_i32, %c0_i32_0 : i32, i32
  }
}

</mosaic_0001>

<llo_original>
// kernel: tpu_custom_call.1
$region0: #{tpu_custom_call.1}
  #allocation0 [shape = 'u32[]', space=smem, size = 0x4, offset = 0x4, fixed_abs, tag = 'smem constant byte address 0x4 - core index']
  #allocation1 [shape = 'u32[144,128]{1,0:T(1,128)}', space=vmem, size = 0x12000, scoped, tag = 'internal scratch']
  %s0 = inlined_call_operand.hbm [shape: bf16[128,1152], index: 0, kind: input, shape index: {}]
  %s1 = inlined_call_operand.hbm [shape: bf16[1152,128], index: 1, kind: input, shape index: {}]
  %s2 = inlined_call_operand.hbm [shape: f32[128,128], index: 2, kind: output, shape index: {0}]
  %s3 = inlined_call_operand.hbm [shape: f32[8,128], index: 3, kind: output, shape index: {1}]
  %4 = xla_tuple %s2, %s3
  %s5 = sld [smem:[#allocation0]]
  $region42: #{tpu_custom_call.1} parent=0
    _
  %s7 = ssub.s32 1, %s5
  %s8 = scalar_select 0, %s7, %s5
  $region1: #{tpu_custom_call.1} parent=0
    #allocation2 [shape = 'u8[294912]{0}', space=vmem, size = 0x48000, scoped, tag = 'input window, operand 0, single buffered']
    #allocation3 [shape = 's32[1]{0}', space=sflag, size = 0x4, scoped, tag = 'scoped memory for tpu_custom_call.1']
    #allocation4 [shape = 's32[1]{0}', space=sflag, size = 0x4, scoped, tag = 'scoped memory for tpu_custom_call.1']
    #allocation5 [shape = 'u8[294912]{0}', space=vmem, size = 0x48000, scoped, tag = 'input window, operand 1, single buffered']
    #allocation6 [shape = 's32[1]{0}', space=sflag, size = 0x4, scoped, tag = 'scoped memory for tpu_custom_call.1']
    #allocation7 [shape = 'u8[65536]{0}', space=vmem, size = 0x10000, scoped, tag = 'output window, operand 0, single buffered']
    #allocation8 [shape = 'u8[4096]{0}', space=vmem, size = 0x1000, scoped, tag = 'output window, operand 1, single buffered']
    #allocation9 [shape = 's32[1]{0}', space=sflag, size = 0x4, scoped, tag = 'scoped memory for tpu_custom_call.1']
    %9 = vsyncpa [#allocation3], 0
    %10 = vsyncpa [#allocation6], 0
    %11 = vsyncpa [#allocation4], 0
    %12 = vsyncpa [#allocation9], 0
    // Predicated region
    $region2: #{tpu_custom_call.1} parent=1 // pred_check
      _
    $region3: #{tpu_custom_call.1} parent=1 // pred_check_branch
      %14 = sbr.rel (0) target = $region5
    $region4: #{tpu_custom_call.1} parent=1 // pred_region
      %s16 = ssub.s32 9216, 9216
      %17 = vsyncadd [#allocation3], %s16
      %s18 = sshll.u32 [#allocation2], 4
      %s19 = int_to_ptr.vmem [resolvable:$true] %s18
      %24 = dma.hbm_to_vmem [thread:$0]  %s0, 9216, %s19, [#allocation3], 576, 576, 36
    $region5: #{tpu_custom_call.1} parent=1 // pred_fallthru
      _
    // Predicated region
    $region6: #{tpu_custom_call.1} parent=1 // pred_check
      _
    $region7: #{tpu_custom_call.1} parent=1 // pred_check_branch
      %26 = sbr.rel (0) target = $region9
    $region8: #{tpu_custom_call.1} parent=1 // pred_region
      %s28 = ssub.s32 9216, 9216
      %29 = vsyncadd [#allocation6], %s28
      %s30 = sshll.u32 [#allocation5], 4
      %s31 = int_to_ptr.vmem [resolvable:$true] %s30
      %36 = dma.hbm_to_vmem [thread:$0]  %s1, 9216, %s31, [#allocation6], 64, 64, 4
    $region9: #{tpu_custom_call.1} parent=1 // pred_fallthru
      _
    // Predicated region
    $region10: #{tpu_custom_call.1} parent=1 // pred_check
      _
    $region11: #{tpu_custom_call.1} parent=1 // pred_check_branch
      %38 = sbr.rel (0) target = $region13
    $region12: #{tpu_custom_call.1} parent=1 // pred_region
      %39 = dma.done [#allocation3], 9216
    $region13: #{tpu_custom_call.1} parent=1 // pred_fallthru
      _
    // Predicated region
    $region14: #{tpu_custom_call.1} parent=1 // pred_check
      _
    $region15: #{tpu_custom_call.1} parent=1 // pred_check_branch
      %41 = sbr.rel (0) target = $region17
    $region16: #{tpu_custom_call.1} parent=1 // pred_region
      %42 = dma.done [#allocation6], 9216
    $region17: #{tpu_custom_call.1} parent=1 // pred_fallthru
      _
    %v44 = vld [vmem:[#allocation2] sm:$0xff]
    %v45 = vld [vmem:[#allocation2 + $0x8] sm:$0xff]
    %v46 = vld [vmem:[#allocation2 + $0x10] sm:$0xff]
    %v47 = vld [vmem:[#allocation2 + $0x18] sm:$0xff]
    %v48 = vld [vmem:[#allocation2 + $0x20] sm:$0xf]
    %v49 = vld [vmem:[#allocation2 + $0x24] sm:$0xff]
    %v50 = vld [vmem:[#allocation2 + $0x2c] sm:$0xff]
    %v51 = vld [vmem:[#allocation2 + $0x34] sm:$0xff]
    %v52 = vld [vmem:[#allocation2 + $0x3c] sm:$0xff]
    %v53 = vld [vmem:[#allocation2 + $0x44] sm:$0xf]
    %v54 = vld [vmem:[#allocation2 + $0x48] sm:$0xff]
    %v55 = vld [vmem:[#allocation2 + $0x50] sm:$0xff]
    %v56 = vld [vmem:[#allocation2 + $0x58] sm:$0xff]
    %v57 = vld [vmem:[#allocation2 + $0x60] sm:$0xff]
    %v58 = vld [vmem:[#allocation2 + $0x68] sm:$0xf]
    %v59 = vld [vmem:[#allocation2 + $0x6c] sm:$0xff]
    %v60 = vld [vmem:[#allocation2 + $0x74] sm:$0xff]
    %v61 = vld [vmem:[#allocation2 + $0x7c] sm:$0xff]
    %v62 = vld [vmem:[#allocation2 + $0x84] sm:$0xff]
    %v63 = vld [vmem:[#allocation2 + $0x8c] sm:$0xf]
    %v64 = vld [vmem:[#allocation2 + $0x90] sm:$0xff]
    %v65 = vld [vmem:[#allocation2 + $0x98] sm:$0xff]
    %v66 = vld [vmem:[#allocation2 + $0xa0] sm:$0xff]
    %v67 = vld [vmem:[#allocation2 + $0xa8] sm:$0xff]
    %v68 = vld [vmem:[#allocation2 + $0xb0] sm:$0xf]
    %v69 = vld [vmem:[#allocation2 + $0xb4] sm:$0xff]
    %v70 = vld [vmem:[#allocation2 + $0xbc] sm:$0xff]
    %v71 = vld [vmem:[#allocation2 + $0xc4] sm:$0xff]
    %v72 = vld [vmem:[#allocation2 + $0xcc] sm:$0xff]
    %v73 = vld [vmem:[#allocation2 + $0xd4] sm:$0xf]
    %v74 = vld [vmem:[#allocation2 + $0xd8] sm:$0xff]
    %v75 = vld [vmem:[#allocation2 + $0xe0] sm:$0xff]
    %v76 = vld [vmem:[#allocation2 + $0xe8] sm:$0xff]
    %v77 = vld [vmem:[#allocation2 + $0xf0] sm:$0xff]
    %v78 = vld [vmem:[#allocation2 + $0xf8] sm:$0xf]
    %v79 = vld [vmem:[#allocation2 + $0xfc] sm:$0xff]
    %v80 = vld [vmem:[#allocation2 + $0x104] sm:$0xff]
    %v81 = vld [vmem:[#allocation2 + $0x10c] sm:$0xff]
    %v82 = vld [vmem:[#allocation2 + $0x114] sm:$0xff]
    %v83 = vld [vmem:[#allocation2 + $0x11c] sm:$0xf]
    %v84 = vld [vmem:[#allocation2 + $0x120] sm:$0xff]
    %v85 = vld [vmem:[#allocation2 + $0x128] sm:$0xff]
    %v86 = vld [vmem:[#allocation2 + $0x130] sm:$0xff]
    %v87 = vld [vmem:[#allocation2 + $0x138] sm:$0xff]
    %v88 = vld [vmem:[#allocation2 + $0x140] sm:$0xf]
    %v89 = vld [vmem:[#allocation2 + $0x144] sm:$0xff]
    %v90 = vld [vmem:[#allocation2 + $0x14c] sm:$0xff]
    %v91 = vld [vmem:[#allocation2 + $0x154] sm:$0xff]
    %v92 = vld [vmem:[#allocation2 + $0x15c] sm:$0xff]
    %v93 = vld [vmem:[#allocation2 + $0x164] sm:$0xf]
    %v94 = vld [vmem:[#allocation2 + $0x168] sm:$0xff]
    %v95 = vld [vmem:[#allocation2 + $0x170] sm:$0xff]
    %v96 = vld [vmem:[#allocation2 + $0x178] sm:$0xff]
    %v97 = vld [vmem:[#allocation2 + $0x180] sm:$0xff]
    %v98 = vld [vmem:[#allocation2 + $0x188] sm:$0xf]
    %v99 = vld [vmem:[#allocation2 + $0x18c] sm:$0xff]
    %v100 = vld [vmem:[#allocation2 + $0x194] sm:$0xff]
    %v101 = vld [vmem:[#allocation2 + $0x19c] sm:$0xff]
    %v102 = vld [vmem:[#allocation2 + $0x1a4] sm:$0xff]
    %v103 = vld [vmem:[#allocation2 + $0x1ac] sm:$0xf]
    %v104 = vld [vmem:[#allocation2 + $0x1b0] sm:$0xff]
    %v105 = vld [vmem:[#allocation2 + $0x1b8] sm:$0xff]
    %v106 = vld [vmem:[#allocation2 + $0x1c0] sm:$0xff]
    %v107 = vld [vmem:[#allocation2 + $0x1c8] sm:$0xff]
    %v108 = vld [vmem:[#allocation2 + $0x1d0] sm:$0xf]
    %v109 = vld [vmem:[#allocation2 + $0x1d4] sm:$0xff]
    %v110 = vld [vmem:[#allocation2 + $0x1dc] sm:$0xff]
    %v111 = vld [vmem:[#allocation2 + $0x1e4] sm:$0xff]
    %v112 = vld [vmem:[#allocation2 + $0x1ec] sm:$0xff]
    %v113 = vld [vmem:[#allocation2 + $0x1f4] sm:$0xf]
    %v114 = vld [vmem:[#allocation2 + $0x1f8] sm:$0xff]
    %v115 = vld [vmem:[#allocation2 + $0x200] sm:$0xff]
    %v116 = vld [vmem:[#allocation2 + $0x208] sm:$0xff]
    %v117 = vld [vmem:[#allocation2 + $0x210] sm:$0xff]
    %v118 = vld [vmem:[#allocation2 + $0x218] sm:$0xf]
    %v119 = vld [vmem:[#allocation2 + $0x21c] sm:$0xff]
    %v120 = vld [vmem:[#allocation2 + $0x224] sm:$0xff]
    %v121 = vld [vmem:[#allocation2 + $0x22c] sm:$0xff]
    %v122 = vld [vmem:[#allocation2 + $0x234] sm:$0xff]
    %v123 = vld [vmem:[#allocation2 + $0x23c] sm:$0xf]
    %v124 = vld [vmem:[#allocation5] sm:$0xf]
    %v125 = vld [vmem:[#allocation5 + $0x4] sm:$0xf]
    %v126 = vld [vmem:[#allocation5 + $0x8] sm:$0xf]
    %v127 = vld [vmem:[#allocation5 + $0xc] sm:$0xf]
    %v128 = vld [vmem:[#allocation5 + $0x10] sm:$0xf]
    %v129 = vld [vmem:[#allocation5 + $0x14] sm:$0xf]
    %v130 = vld [vmem:[#allocation5 + $0x18] sm:$0xf]
    %v131 = vld [vmem:[#allocation5 + $0x1c] sm:$0xf]
    %v132 = vld [vmem:[#allocation5 + $0x20] sm:$0xf]
    %v133 = vld [vmem:[#allocation5 + $0x24] sm:$0xf]
    %v134 = vld [vmem:[#allocation5 + $0x28] sm:$0xf]
    %v135 = vld [vmem:[#allocation5 + $0x2c] sm:$0xf]
    %v136 = vld [vmem:[#allocation5 + $0x30] sm:$0xf]
    %v137 = vld [vmem:[#allocation5 + $0x34] sm:$0xf]
    %v138 = vld [vmem:[#allocation5 + $0x38] sm:$0xf]
    %v139 = vld [vmem:[#allocation5 + $0x3c] sm:$0xf]
    %v140 = vld [vmem:[#allocation5 + $0x40] sm:$0xf]
    %v141 = vld [vmem:[#allocation5 + $0x44] sm:$0xf]
    %v142 = vld [vmem:[#allocation5 + $0x48] sm:$0xf]
    %v143 = vld [vmem:[#allocation5 + $0x4c] sm:$0xf]
    %v144 = vld [vmem:[#allocation5 + $0x50] sm:$0xf]
    %v145 = vld [vmem:[#allocation5 + $0x54] sm:$0xf]
    %v146 = vld [vmem:[#allocation5 + $0x58] sm:$0xf]
    %v147 = vld [vmem:[#allocation5 + $0x5c] sm:$0xf]
    %v148 = vld [vmem:[#allocation5 + $0x60] sm:$0xf]
    %v149 = vld [vmem:[#allocation5 + $0x64] sm:$0xf]
    %v150 = vld [vmem:[#allocation5 + $0x68] sm:$0xf]
    %v151 = vld [vmem:[#allocation5 + $0x6c] sm:$0xf]
    %v152 = vld [vmem:[#allocation5 + $0x70] sm:$0xf]
    %v153 = vld [vmem:[#allocation5 + $0x74] sm:$0xf]
    %v154 = vld [vmem:[#allocation5 + $0x78] sm:$0xf]
    %v155 = vld [vmem:[#allocation5 + $0x7c] sm:$0xf]
    %v156 = vld [vmem:[#allocation5 + $0x80] sm:$0xf]
    %v157 = vld [vmem:[#allocation5 + $0x84] sm:$0xf]
    %v158 = vld [vmem:[#allocation5 + $0x88] sm:$0xf]
    %v159 = vld [vmem:[#allocation5 + $0x8c] sm:$0xf]
    %v160 = vld [vmem:[#allocation5 + $0x90] sm:$0xf]
    %v161 = vld [vmem:[#allocation5 + $0x94] sm:$0xf]
    %v162 = vld [vmem:[#allocation5 + $0x98] sm:$0xf]
    %v163 = vld [vmem:[#allocation5 + $0x9c] sm:$0xf]
    %v164 = vld [vmem:[#allocation5 + $0xa0] sm:$0xf]
    %v165 = vld [vmem:[#allocation5 + $0xa4] sm:$0xf]
    %v166 = vld [vmem:[#allocation5 + $0xa8] sm:$0xf]
    %v167 = vld [vmem:[#allocation5 + $0xac] sm:$0xf]
    %v168 = vld [vmem:[#allocation5 + $0xb0] sm:$0xf]
    %v169 = vld [vmem:[#allocation5 + $0xb4] sm:$0xf]
    %v170 = vld [vmem:[#allocation5 + $0xb8] sm:$0xf]
    %v171 = vld [vmem:[#allocation5 + $0xbc] sm:$0xf]
    %v172 = vld [vmem:[#allocation5 + $0xc0] sm:$0xf]
    %v173 = vld [vmem:[#allocation5 + $0xc4] sm:$0xf]
    %v174 = vld [vmem:[#allocation5 + $0xc8] sm:$0xf]
    %v175 = vld [vmem:[#allocation5 + $0xcc] sm:$0xf]
    %v176 = vld [vmem:[#allocation5 + $0xd0] sm:$0xf]
    %v177 = vld [vmem:[#allocation5 + $0xd4] sm:$0xf]
    %v178 = vld [vmem:[#allocation5 + $0xd8] sm:$0xf]
    %v179 = vld [vmem:[#allocation5 + $0xdc] sm:$0xf]
    %v180 = vld [vmem:[#allocation5 + $0xe0] sm:$0xf]
    %v181 = vld [vmem:[#allocation5 + $0xe4] sm:$0xf]
    %v182 = vld [vmem:[#allocation5 + $0xe8] sm:$0xf]
    %v183 = vld [vmem:[#allocation5 + $0xec] sm:$0xf]
    %v184 = vld [vmem:[#allocation5 + $0xf0] sm:$0xf]
    %v185 = vld [vmem:[#allocation5 + $0xf4] sm:$0xf]
    %v186 = vld [vmem:[#allocation5 + $0xf8] sm:$0xf]
    %v187 = vld [vmem:[#allocation5 + $0xfc] sm:$0xf]
    %v188 = vld [vmem:[#allocation5 + $0x100] sm:$0xf]
    %v189 = vld [vmem:[#allocation5 + $0x104] sm:$0xf]
    %v190 = vld [vmem:[#allocation5 + $0x108] sm:$0xf]
    %v191 = vld [vmem:[#allocation5 + $0x10c] sm:$0xf]
    %v192 = vld [vmem:[#allocation5 + $0x110] sm:$0xf]
    %v193 = vld [vmem:[#allocation5 + $0x114] sm:$0xf]
    %v194 = vld [vmem:[#allocation5 + $0x118] sm:$0xf]
    %v195 = vld [vmem:[#allocation5 + $0x11c] sm:$0xf]
    %v196 = vld [vmem:[#allocation5 + $0x120] sm:$0xf]
    %v197 = vld [vmem:[#allocation5 + $0x124] sm:$0xf]
    %v198 = vld [vmem:[#allocation5 + $0x128] sm:$0xf]
    %v199 = vld [vmem:[#allocation5 + $0x12c] sm:$0xf]
    %v200 = vld [vmem:[#allocation5 + $0x130] sm:$0xf]
    %v201 = vld [vmem:[#allocation5 + $0x134] sm:$0xf]
    %v202 = vld [vmem:[#allocation5 + $0x138] sm:$0xf]
    %v203 = vld [vmem:[#allocation5 + $0x13c] sm:$0xf]
    %v204 = vld [vmem:[#allocation5 + $0x140] sm:$0xf]
    %v205 = vld [vmem:[#allocation5 + $0x144] sm:$0xf]
    %v206 = vld [vmem:[#allocation5 + $0x148] sm:$0xf]
    %v207 = vld [vmem:[#allocation5 + $0x14c] sm:$0xf]
    %v208 = vld [vmem:[#allocation5 + $0x150] sm:$0xf]
    %v209 = vld [vmem:[#allocation5 + $0x154] sm:$0xf]
    %v210 = vld [vmem:[#allocation5 + $0x158] sm:$0xf]
    %v211 = vld [vmem:[#allocation5 + $0x15c] sm:$0xf]
    %v212 = vld [vmem:[#allocation5 + $0x160] sm:$0xf]
    %v213 = vld [vmem:[#allocation5 + $0x164] sm:$0xf]
    %v214 = vld [vmem:[#allocation5 + $0x168] sm:$0xf]
    %v215 = vld [vmem:[#allocation5 + $0x16c] sm:$0xf]
    %v216 = vld [vmem:[#allocation5 + $0x170] sm:$0xf]
    %v217 = vld [vmem:[#allocation5 + $0x174] sm:$0xf]
    %v218 = vld [vmem:[#allocation5 + $0x178] sm:$0xf]
    %v219 = vld [vmem:[#allocation5 + $0x17c] sm:$0xf]
    %v220 = vld [vmem:[#allocation5 + $0x180] sm:$0xf]
    %v221 = vld [vmem:[#allocation5 + $0x184] sm:$0xf]
    %v222 = vld [vmem:[#allocation5 + $0x188] sm:$0xf]
    %v223 = vld [vmem:[#allocation5 + $0x18c] sm:$0xf]
    %v224 = vld [vmem:[#allocation5 + $0x190] sm:$0xf]
    %v225 = vld [vmem:[#allocation5 + $0x194] sm:$0xf]
    %v226 = vld [vmem:[#allocation5 + $0x198] sm:$0xf]
    %v227 = vld [vmem:[#allocation5 + $0x19c] sm:$0xf]
    %v228 = vld [vmem:[#allocation5 + $0x1a0] sm:$0xf]
    %v229 = vld [vmem:[#allocation5 + $0x1a4] sm:$0xf]
    %v230 = vld [vmem:[#allocation5 + $0x1a8] sm:$0xf]
    %v231 = vld [vmem:[#allocation5 + $0x1ac] sm:$0xf]
    %v232 = vld [vmem:[#allocation5 + $0x1b0] sm:$0xf]
    %v233 = vld [vmem:[#allocation5 + $0x1b4] sm:$0xf]
    %v234 = vld [vmem:[#allocation5 + $0x1b8] sm:$0xf]
    %v235 = vld [vmem:[#allocation5 + $0x1bc] sm:$0xf]
    %v236 = vld [vmem:[#allocation5 + $0x1c0] sm:$0xf]
    %v237 = vld [vmem:[#allocation5 + $0x1c4] sm:$0xf]
    %v238 = vld [vmem:[#allocation5 + $0x1c8] sm:$0xf]
    %v239 = vld [vmem:[#allocation5 + $0x1cc] sm:$0xf]
    %v240 = vld [vmem:[#allocation5 + $0x1d0] sm:$0xf]
    %v241 = vld [vmem:[#allocation5 + $0x1d4] sm:$0xf]
    %v242 = vld [vmem:[#allocation5 + $0x1d8] sm:$0xf]
    %v243 = vld [vmem:[#allocation5 + $0x1dc] sm:$0xf]
    %v244 = vld [vmem:[#allocation5 + $0x1e0] sm:$0xf]
    %v245 = vld [vmem:[#allocation5 + $0x1e4] sm:$0xf]
    %v246 = vld [vmem:[#allocation5 + $0x1e8] sm:$0xf]
    %v247 = vld [vmem:[#allocation5 + $0x1ec] sm:$0xf]
    %v248 = vld [vmem:[#allocation5 + $0x1f0] sm:$0xf]
    %v249 = vld [vmem:[#allocation5 + $0x1f4] sm:$0xf]
    %v250 = vld [vmem:[#allocation5 + $0x1f8] sm:$0xf]
    %v251 = vld [vmem:[#allocation5 + $0x1fc] sm:$0xf]
    %v252 = vld [vmem:[#allocation5 + $0x200] sm:$0xf]
    %v253 = vld [vmem:[#allocation5 + $0x204] sm:$0xf]
    %v254 = vld [vmem:[#allocation5 + $0x208] sm:$0xf]
    %v255 = vld [vmem:[#allocation5 + $0x20c] sm:$0xf]
    %v256 = vld [vmem:[#allocation5 + $0x210] sm:$0xf]
    %v257 = vld [vmem:[#allocation5 + $0x214] sm:$0xf]
    %v258 = vld [vmem:[#allocation5 + $0x218] sm:$0xf]
    %v259 = vld [vmem:[#allocation5 + $0x21c] sm:$0xf]
    %v260 = vld [vmem:[#allocation5 + $0x220] sm:$0xf]
    %v261 = vld [vmem:[#allocation5 + $0x224] sm:$0xf]
    %v262 = vld [vmem:[#allocation5 + $0x228] sm:$0xf]
    %v263 = vld [vmem:[#allocation5 + $0x22c] sm:$0xf]
    %v264 = vld [vmem:[#allocation5 + $0x230] sm:$0xf]
    %v265 = vld [vmem:[#allocation5 + $0x234] sm:$0xf]
    %v266 = vld [vmem:[#allocation5 + $0x238] sm:$0xf]
    %v267 = vld [vmem:[#allocation5 + $0x23c] sm:$0xf]
    %v348 = vunpack.c.l.b16 %v44
    %v349 = vunpack.c.h.b16 %v44
    %v350 = vunpack.c.l.b16 %v45
    %v351 = vunpack.c.h.b16 %v45
    %v352 = vunpack.c.l.b16 %v46
    %v353 = vunpack.c.h.b16 %v46
    %v354 = vunpack.c.l.b16 %v47
    %v355 = vunpack.c.h.b16 %v47
    %v356 = vunpack.c.l.b16 %v48
    %v357 = vunpack.c.l.b16 %v49
    %v358 = vunpack.c.h.b16 %v49
    %v359 = vunpack.c.l.b16 %v50
    %v360 = vunpack.c.h.b16 %v50
    %v361 = vunpack.c.l.b16 %v51
    %v362 = vunpack.c.h.b16 %v51
    %v363 = vunpack.c.l.b16 %v52
    %v364 = vunpack.c.h.b16 %v52
    %v365 = vunpack.c.l.b16 %v53
    %v366 = vunpack.c.l.b16 %v54
    %v367 = vunpack.c.h.b16 %v54
    %v368 = vunpack.c.l.b16 %v55
    %v369 = vunpack.c.h.b16 %v55
    %v370 = vunpack.c.l.b16 %v56
    %v371 = vunpack.c.h.b16 %v56
    %v372 = vunpack.c.l.b16 %v57
    %v373 = vunpack.c.h.b16 %v57
    %v374 = vunpack.c.l.b16 %v58
    %v375 = vunpack.c.l.b16 %v59
    %v376 = vunpack.c.h.b16 %v59
    %v377 = vunpack.c.l.b16 %v60
    %v378 = vunpack.c.h.b16 %v60
    %v379 = vunpack.c.l.b16 %v61
    %v380 = vunpack.c.h.b16 %v61
    %v381 = vunpack.c.l.b16 %v62
    %v382 = vunpack.c.h.b16 %v62
    %v383 = vunpack.c.l.b16 %v63
    %v384 = vunpack.c.l.b16 %v64
    %v385 = vunpack.c.h.b16 %v64
    %v386 = vunpack.c.l.b16 %v65
    %v387 = vunpack.c.h.b16 %v65
    %v388 = vunpack.c.l.b16 %v66
    %v389 = vunpack.c.h.b16 %v66
    %v390 = vunpack.c.l.b16 %v67
    %v391 = vunpack.c.h.b16 %v67
    %v392 = vunpack.c.l.b16 %v68
    %v393 = vunpack.c.l.b16 %v69
    %v394 = vunpack.c.h.b16 %v69
    %v395 = vunpack.c.l.b16 %v70
    %v396 = vunpack.c.h.b16 %v70
    %v397 = vunpack.c.l.b16 %v71
    %v398 = vunpack.c.h.b16 %v71
    %v399 = vunpack.c.l.b16 %v72
    %v400 = vunpack.c.h.b16 %v72
    %v401 = vunpack.c.l.b16 %v73
    %v402 = vunpack.c.l.b16 %v74
    %v403 = vunpack.c.h.b16 %v74
    %v404 = vunpack.c.l.b16 %v75
    %v405 = vunpack.c.h.b16 %v75
    %v406 = vunpack.c.l.b16 %v76
    %v407 = vunpack.c.h.b16 %v76
    %v408 = vunpack.c.l.b16 %v77
    %v409 = vunpack.c.h.b16 %v77
    %v410 = vunpack.c.l.b16 %v78
    %v411 = vunpack.c.l.b16 %v79
    %v412 = vunpack.c.h.b16 %v79
    %v413 = vunpack.c.l.b16 %v80
    %v414 = vunpack.c.h.b16 %v80
    %v415 = vunpack.c.l.b16 %v81
    %v416 = vunpack.c.h.b16 %v81
    %v417 = vunpack.c.l.b16 %v82
    %v418 = vunpack.c.h.b16 %v82
    %v419 = vunpack.c.l.b16 %v83
    %v420 = vunpack.c.l.b16 %v84
    %v421 = vunpack.c.h.b16 %v84
    %v422 = vunpack.c.l.b16 %v85
    %v423 = vunpack.c.h.b16 %v85
    %v424 = vunpack.c.l.b16 %v86
    %v425 = vunpack.c.h.b16 %v86
    %v426 = vunpack.c.l.b16 %v87
    %v427 = vunpack.c.h.b16 %v87
    %v428 = vunpack.c.l.b16 %v88
    %v429 = vunpack.c.l.b16 %v89
    %v430 = vunpack.c.h.b16 %v89
    %v431 = vunpack.c.l.b16 %v90
    %v432 = vunpack.c.h.b16 %v90
    %v433 = vunpack.c.l.b16 %v91
    %v434 = vunpack.c.h.b16 %v91
    %v435 = vunpack.c.l.b16 %v92
    %v436 = vunpack.c.h.b16 %v92
    %v437 = vunpack.c.l.b16 %v93
    %v438 = vunpack.c.l.b16 %v94
    %v439 = vunpack.c.h.b16 %v94
    %v440 = vunpack.c.l.b16 %v95
    %v441 = vunpack.c.h.b16 %v95
    %v442 = vunpack.c.l.b16 %v96
    %v443 = vunpack.c.h.b16 %v96
    %v444 = vunpack.c.l.b16 %v97
    %v445 = vunpack.c.h.b16 %v97
    %v446 = vunpack.c.l.b16 %v98
    %v447 = vunpack.c.l.b16 %v99
    %v448 = vunpack.c.h.b16 %v99
    %v449 = vunpack.c.l.b16 %v100
    %v450 = vunpack.c.h.b16 %v100
    %v451 = vunpack.c.l.b16 %v101
    %v452 = vunpack.c.h.b16 %v101
    %v453 = vunpack.c.l.b16 %v102
    %v454 = vunpack.c.h.b16 %v102
    %v455 = vunpack.c.l.b16 %v103
    %v456 = vunpack.c.l.b16 %v104
    %v457 = vunpack.c.h.b16 %v104
    %v458 = vunpack.c.l.b16 %v105
    %v459 = vunpack.c.h.b16 %v105
    %v460 = vunpack.c.l.b16 %v106
    %v461 = vunpack.c.h.b16 %v106
    %v462 = vunpack.c.l.b16 %v107
    %v463 = vunpack.c.h.b16 %v107
    %v464 = vunpack.c.l.b16 %v108
    %v465 = vunpack.c.l.b16 %v109
    %v466 = vunpack.c.h.b16 %v109
    %v467 = vunpack.c.l.b16 %v110
    %v468 = vunpack.c.h.b16 %v110
    %v469 = vunpack.c.l.b16 %v111
    %v470 = vunpack.c.h.b16 %v111
    %v471 = vunpack.c.l.b16 %v112
    %v472 = vunpack.c.h.b16 %v112
    %v473 = vunpack.c.l.b16 %v113
    %v474 = vunpack.c.l.b16 %v114
    %v475 = vunpack.c.h.b16 %v114
    %v476 = vunpack.c.l.b16 %v115
    %v477 = vunpack.c.h.b16 %v115
    %v478 = vunpack.c.l.b16 %v116
    %v479 = vunpack.c.h.b16 %v116
    %v480 = vunpack.c.l.b16 %v117
    %v481 = vunpack.c.h.b16 %v117
    %v482 = vunpack.c.l.b16 %v118
    %v483 = vunpack.c.l.b16 %v119
    %v484 = vunpack.c.h.b16 %v119
    %v485 = vunpack.c.l.b16 %v120
    %v486 = vunpack.c.h.b16 %v120
    %v487 = vunpack.c.l.b16 %v121
    %v488 = vunpack.c.h.b16 %v121
    %v489 = vunpack.c.l.b16 %v122
    %v490 = vunpack.c.h.b16 %v122
    %v491 = vunpack.c.l.b16 %v123
    %v492 = vpack.c.b16 %v357, %v348
    %v493 = vpack.c.b16 %v358, %v349
    %v494 = vpack.c.b16 %v359, %v350
    %v495 = vpack.c.b16 %v360, %v351
    %v496 = vpack.c.b16 %v361, %v352
    %v497 = vpack.c.b16 %v362, %v353
    %v498 = vpack.c.b16 %v363, %v354
    %v499 = vpack.c.b16 %v364, %v355
    %v500 = vpack.c.b16 %v365, %v356
    %v501 = vpack.c.b16 %v375, %v366
    %v502 = vpack.c.b16 %v376, %v367
    %v503 = vpack.c.b16 %v377, %v368
    %v504 = vpack.c.b16 %v378, %v369
    %v505 = vpack.c.b16 %v379, %v370
    %v506 = vpack.c.b16 %v380, %v371
    %v507 = vpack.c.b16 %v381, %v372
    %v508 = vpack.c.b16 %v382, %v373
    %v509 = vpack.c.b16 %v383, %v374
    %v510 = vpack.c.b16 %v393, %v384
    %v511 = vpack.c.b16 %v394, %v385
    %v512 = vpack.c.b16 %v395, %v386
    %v513 = vpack.c.b16 %v396, %v387
    %v514 = vpack.c.b16 %v397, %v388
    %v515 = vpack.c.b16 %v398, %v389
    %v516 = vpack.c.b16 %v399, %v390
    %v517 = vpack.c.b16 %v400, %v391
    %v518 = vpack.c.b16 %v401, %v392
    %v519 = vpack.c.b16 %v411, %v402
    %v520 = vpack.c.b16 %v412, %v403
    %v521 = vpack.c.b16 %v413, %v404
    %v522 = vpack.c.b16 %v414, %v405
    %v523 = vpack.c.b16 %v415, %v406
    %v524 = vpack.c.b16 %v416, %v407
    %v525 = vpack.c.b16 %v417, %v408
    %v526 = vpack.c.b16 %v418, %v409
    %v527 = vpack.c.b16 %v419, %v410
    %v528 = vpack.c.b16 %v429, %v420
    %v529 = vpack.c.b16 %v430, %v421
    %v530 = vpack.c.b16 %v431, %v422
    %v531 = vpack.c.b16 %v432, %v423
    %v532 = vpack.c.b16 %v433, %v424
    %v533 = vpack.c.b16 %v434, %v425
    %v534 = vpack.c.b16 %v435, %v426
    %v535 = vpack.c.b16 %v436, %v427
    %v536 = vpack.c.b16 %v437, %v428
    %v537 = vpack.c.b16 %v447, %v438
    %v538 = vpack.c.b16 %v448, %v439
    %v539 = vpack.c.b16 %v449, %v440
    %v540 = vpack.c.b16 %v450, %v441
    %v541 = vpack.c.b16 %v451, %v442
    %v542 = vpack.c.b16 %v452, %v443
    %v543 = vpack.c.b16 %v453, %v444
    %v544 = vpack.c.b16 %v454, %v445
    %v545 = vpack.c.b16 %v455, %v446
    %v546 = vpack.c.b16 %v465, %v456
    %v547 = vpack.c.b16 %v466, %v457
    %v548 = vpack.c.b16 %v467, %v458
    %v549 = vpack.c.b16 %v468, %v459
    %v550 = vpack.c.b16 %v469, %v460
    %v551 = vpack.c.b16 %v470, %v461
    %v552 = vpack.c.b16 %v471, %v462
    %v553 = vpack.c.b16 %v472, %v463
    %v554 = vpack.c.b16 %v473, %v464
    %v555 = vpack.c.b16 %v483, %v474
    %v556 = vpack.c.b16 %v484, %v475
    %v557 = vpack.c.b16 %v485, %v476
    %v558 = vpack.c.b16 %v486, %v477
    %v559 = vpack.c.b16 %v487, %v478
    %v560 = vpack.c.b16 %v488, %v479
    %v561 = vpack.c.b16 %v489, %v480
    %v562 = vpack.c.b16 %v490, %v481
    %v563 = vpack.c.b16 %v491, %v482
    %v780 = vunpack.c.l.b16 %v124
    %v781 = vunpack.c.l.b16 %v125
    %v782 = vunpack.c.l.b16 %v126
    %v783 = vunpack.c.l.b16 %v127
    %v784 = vunpack.c.l.b16 %v128
    %v785 = vunpack.c.l.b16 %v129
    %v786 = vunpack.c.l.b16 %v130
    %v787 = vunpack.c.l.b16 %v131
    %v788 = vunpack.c.l.b16 %v132
    %v789 = vunpack.c.l.b16 %v133
    %v790 = vunpack.c.l.b16 %v134
    %v791 = vunpack.c.l.b16 %v135
    %v792 = vunpack.c.l.b16 %v136
    %v793 = vunpack.c.l.b16 %v137
    %v794 = vunpack.c.l.b16 %v138
    %v795 = vunpack.c.l.b16 %v139
    %v796 = vunpack.c.l.b16 %v140
    %v797 = vunpack.c.l.b16 %v141
    %v798 = vunpack.c.l.b16 %v142
    %v799 = vunpack.c.l.b16 %v143
    %v800 = vunpack.c.l.b16 %v144
    %v801 = vunpack.c.l.b16 %v145
    %v802 = vunpack.c.l.b16 %v146
    %v803 = vunpack.c.l.b16 %v147
    %v804 = vunpack.c.l.b16 %v148
    %v805 = vunpack.c.l.b16 %v149
    %v806 = vunpack.c.l.b16 %v150
    %v807 = vunpack.c.l.b16 %v151
    %v808 = vunpack.c.l.b16 %v152
    %v809 = vunpack.c.l.b16 %v153
    %v810 = vunpack.c.l.b16 %v154
    %v811 = vunpack.c.l.b16 %v155
    %v812 = vunpack.c.l.b16 %v156
    %v813 = vunpack.c.l.b16 %v157
    %v814 = vunpack.c.l.b16 %v158
    %v815 = vunpack.c.l.b16 %v159
    %v816 = vunpack.c.l.b16 %v160
    %v817 = vunpack.c.l.b16 %v161
    %v818 = vunpack.c.l.b16 %v162
    %v819 = vunpack.c.l.b16 %v163
    %v820 = vunpack.c.l.b16 %v164
    %v821 = vunpack.c.l.b16 %v165
    %v822 = vunpack.c.l.b16 %v166
    %v823 = vunpack.c.l.b16 %v167
    %v824 = vunpack.c.l.b16 %v168
    %v825 = vunpack.c.l.b16 %v169
    %v826 = vunpack.c.l.b16 %v170
    %v827 = vunpack.c.l.b16 %v171
    %v828 = vunpack.c.l.b16 %v172
    %v829 = vunpack.c.l.b16 %v173
    %v830 = vunpack.c.l.b16 %v174
    %v831 = vunpack.c.l.b16 %v175
    %v832 = vunpack.c.l.b16 %v176
    %v833 = vunpack.c.l.b16 %v177
    %v834 = vunpack.c.l.b16 %v178
    %v835 = vunpack.c.l.b16 %v179
    %v836 = vunpack.c.l.b16 %v180
    %v837 = vunpack.c.l.b16 %v181
    %v838 = vunpack.c.l.b16 %v182
    %v839 = vunpack.c.l.b16 %v183
    %v840 = vunpack.c.l.b16 %v184
    %v841 = vunpack.c.l.b16 %v185
    %v842 = vunpack.c.l.b16 %v186
    %v843 = vunpack.c.l.b16 %v187
    %v844 = vunpack.c.l.b16 %v188
    %v845 = vunpack.c.l.b16 %v189
    %v846 = vunpack.c.l.b16 %v190
    %v847 = vunpack.c.l.b16 %v191
    %v848 = vunpack.c.l.b16 %v192
    %v849 = vunpack.c.l.b16 %v193
    %v850 = vunpack.c.l.b16 %v194
    %v851 = vunpack.c.l.b16 %v195
    %v852 = vunpack.c.l.b16 %v196
    %v853 = vunpack.c.l.b16 %v197
    %v854 = vunpack.c.l.b16 %v198
    %v855 = vunpack.c.l.b16 %v199
    %v856 = vunpack.c.l.b16 %v200
    %v857 = vunpack.c.l.b16 %v201
    %v858 = vunpack.c.l.b16 %v202
    %v859 = vunpack.c.l.b16 %v203
    %v860 = vunpack.c.l.b16 %v204
    %v861 = vunpack.c.l.b16 %v205
    %v862 = vunpack.c.l.b16 %v206
    %v863 = vunpack.c.l.b16 %v207
    %v864 = vunpack.c.l.b16 %v208
    %v865 = vunpack.c.l.b16 %v209
    %v866 = vunpack.c.l.b16 %v210
    %v867 = vunpack.c.l.b16 %v211
    %v868 = vunpack.c.l.b16 %v212
    %v869 = vunpack.c.l.b16 %v213
    %v870 = vunpack.c.l.b16 %v214
    %v871 = vunpack.c.l.b16 %v215
    %v872 = vunpack.c.l.b16 %v216
    %v873 = vunpack.c.l.b16 %v217
    %v874 = vunpack.c.l.b16 %v218
    %v875 = vunpack.c.l.b16 %v219
    %v876 = vunpack.c.l.b16 %v220
    %v877 = vunpack.c.l.b16 %v221
    %v878 = vunpack.c.l.b16 %v222
    %v879 = vunpack.c.l.b16 %v223
    %v880 = vunpack.c.l.b16 %v224
    %v881 = vunpack.c.l.b16 %v225
    %v882 = vunpack.c.l.b16 %v226
    %v883 = vunpack.c.l.b16 %v227
    %v884 = vunpack.c.l.b16 %v228
    %v885 = vunpack.c.l.b16 %v229
    %v886 = vunpack.c.l.b16 %v230
    %v887 = vunpack.c.l.b16 %v231
    %v888 = vunpack.c.l.b16 %v232
    %v889 = vunpack.c.l.b16 %v233
    %v890 = vunpack.c.l.b16 %v234
    %v891 = vunpack.c.l.b16 %v235
    %v892 = vunpack.c.l.b16 %v236
    %v893 = vunpack.c.l.b16 %v237
    %v894 = vunpack.c.l.b16 %v238
    %v895 = vunpack.c.l.b16 %v239
    %v896 = vunpack.c.l.b16 %v240
    %v897 = vunpack.c.l.b16 %v241
    %v898 = vunpack.c.l.b16 %v242
    %v899 = vunpack.c.l.b16 %v243
    %v900 = vunpack.c.l.b16 %v244
    %v901 = vunpack.c.l.b16 %v245
    %v902 = vunpack.c.l.b16 %v246
    %v903 = vunpack.c.l.b16 %v247
    %v904 = vunpack.c.l.b16 %v248
    %v905 = vunpack.c.l.b16 %v249
    %v906 = vunpack.c.l.b16 %v250
    %v907 = vunpack.c.l.b16 %v251
    %v908 = vunpack.c.l.b16 %v252
    %v909 = vunpack.c.l.b16 %v253
    %v910 = vunpack.c.l.b16 %v254
    %v911 = vunpack.c.l.b16 %v255
    %v912 = vunpack.c.l.b16 %v256
    %v913 = vunpack.c.l.b16 %v257
    %v914 = vunpack.c.l.b16 %v258
    %v915 = vunpack.c.l.b16 %v259
    %v916 = vunpack.c.l.b16 %v260
    %v917 = vunpack.c.l.b16 %v261
    %v918 = vunpack.c.l.b16 %v262
    %v919 = vunpack.c.l.b16 %v263
    %v920 = vunpack.c.l.b16 %v264
    %v921 = vunpack.c.l.b16 %v265
    %v922 = vunpack.c.l.b16 %v266
    %v923 = vunpack.c.l.b16 %v267
    %v924 = vpack.c.b16 %v781, %v780
    %v925 = vpack.c.b16 %v783, %v782
    %v926 = vpack.c.b16 %v785, %v784
    %v927 = vpack.c.b16 %v787, %v786
    %v928 = vpack.c.b16 %v789, %v788
    %v929 = vpack.c.b16 %v791, %v790
    %v930 = vpack.c.b16 %v793, %v792
    %v931 = vpack.c.b16 %v795, %v794
    %v932 = vpack.c.b16 %v797, %v796
    %v933 = vpack.c.b16 %v799, %v798
    %v934 = vpack.c.b16 %v801, %v800
    %v935 = vpack.c.b16 %v803, %v802
    %v936 = vpack.c.b16 %v805, %v804
    %v937 = vpack.c.b16 %v807, %v806
    %v938 = vpack.c.b16 %v809, %v808
    %v939 = vpack.c.b16 %v811, %v810
    %v940 = vpack.c.b16 %v813, %v812
    %v941 = vpack.c.b16 %v815, %v814
    %v942 = vpack.c.b16 %v817, %v816
    %v943 = vpack.c.b16 %v819, %v818
    %v944 = vpack.c.b16 %v821, %v820
    %v945 = vpack.c.b16 %v823, %v822
    %v946 = vpack.c.b16 %v825, %v824
    %v947 = vpack.c.b16 %v827, %v826
    %v948 = vpack.c.b16 %v829, %v828
    %v949 = vpack.c.b16 %v831, %v830
    %v950 = vpack.c.b16 %v833, %v832
    %v951 = vpack.c.b16 %v835, %v834
    %v952 = vpack.c.b16 %v837, %v836
    %v953 = vpack.c.b16 %v839, %v838
    %v954 = vpack.c.b16 %v841, %v840
    %v955 = vpack.c.b16 %v843, %v842
    %v956 = vpack.c.b16 %v845, %v844
    %v957 = vpack.c.b16 %v847, %v846
    %v958 = vpack.c.b16 %v849, %v848
    %v959 = vpack.c.b16 %v851, %v850
    %v960 = vpack.c.b16 %v853, %v852
    %v961 = vpack.c.b16 %v855, %v854
    %v962 = vpack.c.b16 %v857, %v856
    %v963 = vpack.c.b16 %v859, %v858
    %v964 = vpack.c.b16 %v861, %v860
    %v965 = vpack.c.b16 %v863, %v862
    %v966 = vpack.c.b16 %v865, %v864
    %v967 = vpack.c.b16 %v867, %v866
    %v968 = vpack.c.b16 %v869, %v868
    %v969 = vpack.c.b16 %v871, %v870
    %v970 = vpack.c.b16 %v873, %v872
    %v971 = vpack.c.b16 %v875, %v874
    %v972 = vpack.c.b16 %v877, %v876
    %v973 = vpack.c.b16 %v879, %v878
    %v974 = vpack.c.b16 %v881, %v880
    %v975 = vpack.c.b16 %v883, %v882
    %v976 = vpack.c.b16 %v885, %v884
    %v977 = vpack.c.b16 %v887, %v886
    %v978 = vpack.c.b16 %v889, %v888
    %v979 = vpack.c.b16 %v891, %v890
    %v980 = vpack.c.b16 %v893, %v892
    %v981 = vpack.c.b16 %v895, %v894
    %v982 = vpack.c.b16 %v897, %v896
    %v983 = vpack.c.b16 %v899, %v898
    %v984 = vpack.c.b16 %v901, %v900
    %v985 = vpack.c.b16 %v903, %v902
    %v986 = vpack.c.b16 %v905, %v904
    %v987 = vpack.c.b16 %v907, %v906
    %v988 = vpack.c.b16 %v909, %v908
    %v989 = vpack.c.b16 %v911, %v910
    %v990 = vpack.c.b16 %v913, %v912
    %v991 = vpack.c.b16 %v915, %v914
    %v992 = vpack.c.b16 %v917, %v916
    %v993 = vpack.c.b16 %v919, %v918
    %v994 = vpack.c.b16 %v921, %v920
    %v995 = vpack.c.b16 %v923, %v922
    %1068 = vmatprep.subr.bf16.mxu0 0
    %1069 = vmatpush1.bf16.msra.mxu0 %v924
    %1070 = vmatprep.subr.bf16.mxu0 0
    %1071 = vmatpush1.bf16.msra.mxu0 %v925
    %1072 = vmatprep.subr.bf16.mxu0 0
    %1073 = vmatpush1.bf16.msra.mxu0 %v926
    %1074 = vmatprep.subr.bf16.mxu0 0
    %1075 = vmatpush1.bf16.msra.mxu0 %v927
    %1076 = vmatprep.subr.bf16.mxu0 0
    %1077 = vmatpush1.bf16.msra.mxu0 %v928
    %1078 = vmatprep.subr.bf16.mxu0 0
    %1079 = vmatpush1.bf16.msra.mxu0 %v929
    %1080 = vmatprep.subr.bf16.mxu0 0
    %1081 = vmatpush1.bf16.msra.mxu0 %v930
    %1082 = vmatprep.subr.bf16.mxu0 0
    %1083 = vmatpush1.bf16.msra.mxu0 %v931
    %1084 = vmatprep.subr.bf16.mxu0 0
    %1085 = vmatpush1.bf16.msra.mxu0 %v932
    %1086 = vmatprep.subr.bf16.mxu0 0
    %1087 = vmatpush1.bf16.msra.mxu0 %v933
    %1088 = vmatprep.subr.bf16.mxu0 0
    %1089 = vmatpush1.bf16.msra.mxu0 %v934
    %1090 = vmatprep.subr.bf16.mxu0 0
    %1091 = vmatpush1.bf16.msra.mxu0 %v935
    %1092 = vmatprep.subr.bf16.mxu0 0
    %1093 = vmatpush1.bf16.msra.mxu0 %v936
    %1094 = vmatprep.subr.bf16.mxu0 0
    %1095 = vmatpush1.bf16.msra.mxu0 %v937
    %1096 = vmatprep.subr.bf16.mxu0 0
    %1097 = vmatpush1.bf16.msra.mxu0 %v938
    %1098 = vmatprep.subr.bf16.mxu0 0
    %1099 = vmatpush1.bf16.msra.mxu0 %v939
    %1100 = vmatprep.mubr.bf16.mxu0 %v493
    %1101 = vmatmul.mubr.bf16.gmra.mrb[0].mxu0 %v492
    %v1102 = vpop.f32.mrb[0].mxu0
    %v1103 = vadd.f32 0.0, %v1102
    %v1104 = vpop.f32.mrb[0].mxu0
    %v1105 = vpop.f32.mrb[0].mxu0
    %v1106 = vadd.f32 0.0, %v1105
    %v1107 = vpop.f32.mrb[0].mxu0
    %1108 = vmatprep.mubr.bf16.mxu0 %v502
    %1109 = vmatmul.mubr.bf16.gmra.mrb[0].mxu0 %v501
    %v1110 = vpop.f32.mrb[0].mxu0
    %v1111 = vadd.f32 0.0, %v1110
    %v1112 = vpop.f32.mrb[0].mxu0
    %v1113 = vpop.f32.mrb[0].mxu0
    %v1114 = vadd.f32 0.0, %v1113
    %v1115 = vpop.f32.mrb[0].mxu0
    %1116 = vmatprep.mubr.bf16.mxu0 %v511
    %1117 = vmatmul.mubr.bf16.gmra.mrb[0].mxu0 %v510
    %v1118 = vpop.f32.mrb[0].mxu0
    %v1119 = vadd.f32 0.0, %v1118
    %v1120 = vpop.f32.mrb[0].mxu0
    %v1121 = vpop.f32.mrb[0].mxu0
    %v1122 = vadd.f32 0.0, %v1121
    %v1123 = vpop.f32.mrb[0].mxu0
    %1124 = vmatprep.mubr.bf16.mxu0 %v520
    %1125 = vmatmul.mubr.bf16.gmra.mrb[0].mxu0 %v519
    %v1126 = vpop.f32.mrb[0].mxu0
    %v1127 = vadd.f32 0.0, %v1126
    %v1128 = vpop.f32.mrb[0].mxu0
    %v1129 = vpop.f32.mrb[0].mxu0
    %v1130 = vadd.f32 0.0, %v1129
    %v1131 = vpop.f32.mrb[0].mxu0
    %1132 = vmatprep.mubr.bf16.mxu0 %v529
    %1133 = vmatmul.mubr.bf16.gmra.mrb[0].mxu0 %v528
    %v1134 = vpop.f32.mrb[0].mxu0
    %v1135 = vadd.f32 0.0, %v1134
    %v1136 = vpop.f32.mrb[0].mxu0
    %v1137 = vpop.f32.mrb[0].mxu0
    %v1138 = vadd.f32 0.0, %v1137
    %v1139 = vpop.f32.mrb[0].mxu0
    %1140 = vmatprep.mubr.bf16.mxu0 %v538
    %1141 = vmatmul.mubr.bf16.gmra.mrb[0].mxu0 %v537
    %v1142 = vpop.f32.mrb[0].mxu0
    %v1143 = vadd.f32 0.0, %v1142
    %v1144 = vpop.f32.mrb[0].mxu0
    %v1145 = vpop.f32.mrb[0].mxu0
    %v1146 = vadd.f32 0.0, %v1145
    %v1147 = vpop.f32.mrb[0].mxu0
    %1148 = vmatprep.mubr.bf16.mxu0 %v547
    %1149 = vmatmul.mubr.bf16.gmra.mrb[0].mxu0 %v546
    %v1150 = vpop.f32.mrb[0].mxu0
    %v1151 = vadd.f32 0.0, %v1150
    %v1152 = vpop.f32.mrb[0].mxu0
    %v1153 = vpop.f32.mrb[0].mxu0
    %v1154 = vadd.f32 0.0, %v1153
    %v1155 = vpop.f32.mrb[0].mxu0
    %1156 = vmatprep.mubr.bf16.mxu0 %v556
    %1157 = vmatmul.mubr.bf16.gmra.mrb[0].mxu0 %v555
    %v1158 = vpop.f32.mrb[0].mxu0
    %v1159 = vadd.f32 0.0, %v1158
    %v1160 = vpop.f32.mrb[0].mxu0
    %v1161 = vpop.f32.mrb[0].mxu0
    %v1162 = vadd.f32 0.0, %v1161
    %v1163 = vpop.f32.mrb[0].mxu0
    %1164 = vdwg.mxu0
    %1165 = vmatprep.subr.bf16.mxu0 0
    %1166 = vmatpush1.bf16.msra.mxu0 %v940
    %1167 = vmatprep.subr.bf16.mxu0 0
    %1168 = vmatpush1.bf16.msra.mxu0 %v941
    %1169 = vmatprep.subr.bf16.mxu0 0
    %1170 = vmatpush1.bf16.msra.mxu0 %v942
    %1171 = vmatprep.subr.bf16.mxu0 0
    %1172 = vmatpush1.bf16.msra.mxu0 %v943
    %1173 = vmatprep.subr.bf16.mxu0 0
    %1174 = vmatpush1.bf16.msra.mxu0 %v944
    %1175 = vmatprep.subr.bf16.mxu0 0
    %1176 = vmatpush1.bf16.msra.mxu0 %v945
    %1177 = vmatprep.subr.bf16.mxu0 0
    %1178 = vmatpush1.bf16.msra.mxu0 %v946
    %1179 = vmatprep.subr.bf16.mxu0 0
    %1180 = vmatpush1.bf16.msra.mxu0 %v947
    %1181 = vmatprep.subr.bf16.mxu0 0
    %1182 = vmatpush1.bf16.msra.mxu0 %v948
    %1183 = vmatprep.subr.bf16.mxu0 0
    %1184 = vmatpush1.bf16.msra.mxu0 %v949
    %1185 = vmatprep.subr.bf16.mxu0 0
    %1186 = vmatpush1.bf16.msra.mxu0 %v950
    %1187 = vmatprep.subr.bf16.mxu0 0
    %1188 = vmatpush1.bf16.msra.mxu0 %v951
    %1189 = vmatprep.subr.bf16.mxu0 0
    %1190 = vmatpush1.bf16.msra.mxu0 %v952
    %1191 = vmatprep.subr.bf16.mxu0 0
    %1192 = vmatpush1.bf16.msra.mxu0 %v953
    %1193 = vmatprep.subr.bf16.mxu0 0
    %1194 = vmatpush1.bf16.msra.mxu0 %v954
    %1195 = vmatprep.subr.bf16.mxu0 0
    %1196 = vmatpush1.bf16.msra.mxu0 %v955
    %1197 = vmatprep.mubr.bf16.mxu0 %v495
    %1198 = vmatmul.mubr.bf16.gmra.mrb[0].mxu0 %v494
    %v1199 = vpop.f32.mrb[0].mxu0
    %v1200 = vadd.f32 %v1103, %v1199
    %v1201 = vpop.f32.mrb[0].mxu0
    %v1202 = vpop.f32.mrb[0].mxu0
    %v1203 = vadd.f32 %v1106, %v1202
    %v1204 = vpop.f32.mrb[0].mxu0
    %1205 = vmatprep.mubr.bf16.mxu0 %v504
    %1206 = vmatmul.mubr.bf16.gmra.mrb[0].mxu0 %v503
    %v1207 = vpop.f32.mrb[0].mxu0
    %v1208 = vadd.f32 %v1111, %v1207
    %v1209 = vpop.f32.mrb[0].mxu0
    %v1210 = vpop.f32.mrb[0].mxu0
    %v1211 = vadd.f32 %v1114, %v1210
    %v1212 = vpop.f32.mrb[0].mxu0
    %1213 = vmatprep.mubr.bf16.mxu0 %v513
    %1214 = vmatmul.mubr.bf16.gmra.mrb[0].mxu0 %v512
    %v1215 = vpop.f32.mrb[0].mxu0
    %v1216 = vadd.f32 %v1119, %v1215
    %v1217 = vpop.f32.mrb[0].mxu0
    %v1218 = vpop.f32.mrb[0].mxu0
    %v1219 = vadd.f32 %v1122, %v1218
    %v1220 = vpop.f32.mrb[0].mxu0
    %1221 = vmatprep.mubr.bf16.mxu0 %v522
    %1222 = vmatmul.mubr.bf16.gmra.mrb[0].mxu0 %v521
    %v1223 = vpop.f32.mrb[0].mxu0
    %v1224 = vadd.f32 %v1127, %v1223
    %v1225 = vpop.f32.mrb[0].mxu0
    %v1226 = vpop.f32.mrb[0].mxu0
    %v1227 = vadd.f32 %v1130, %v1226
    %v1228 = vpop.f32.mrb[0].mxu0
    %1229 = vmatprep.mubr.bf16.mxu0 %v531
    %1230 = vmatmul.mubr.bf16.gmra.mrb[0].mxu0 %v530
    %v1231 = vpop.f32.mrb[0].mxu0
    %v1232 = vadd.f32 %v1135, %v1231
    %v1233 = vpop.f32.mrb[0].mxu0
    %v1234 = vpop.f32.mrb[0].mxu0
    %v1235 = vadd.f32 %v1138, %v1234
    %v1236 = vpop.f32.mrb[0].mxu0
    %1237 = vmatprep.mubr.bf16.mxu0 %v540
    %1238 = vmatmul.mubr.bf16.gmra.mrb[0].mxu0 %v539
    %v1239 = vpop.f32.mrb[0].mxu0
    %v1240 = vadd.f32 %v1143, %v1239
    %v1241 = vpop.f32.mrb[0].mxu0
    %v1242 = vpop.f32.mrb[0].mxu0
    %v1243 = vadd.f32 %v1146, %v1242
    %v1244 = vpop.f32.mrb[0].mxu0
    %1245 = vmatprep.mubr.bf16.mxu0 %v549
    %1246 = vmatmul.mubr.bf16.gmra.mrb[0].mxu0 %v548
    %v1247 = vpop.f32.mrb[0].mxu0
    %v1248 = vadd.f32 %v1151, %v1247
    %v1249 = vpop.f32.mrb[0].mxu0
    %v1250 = vpop.f32.mrb[0].mxu0
    %v1251 = vadd.f32 %v1154, %v1250
    %v1252 = vpop.f32.mrb[0].mxu0
    %1253 = vmatprep.mubr.bf16.mxu0 %v558
    %1254 = vmatmul.mubr.bf16.gmra.mrb[0].mxu0 %v557
    %v1255 = vpop.f32.mrb[0].mxu0
    %v1256 = vadd.f32 %v1159, %v1255
    %v1257 = vpop.f32.mrb[0].mxu0
    %v1258 = vpop.f32.mrb[0].mxu0
    %v1259 = vadd.f32 %v1162, %v1258
    %v1260 = vpop.f32.mrb[0].mxu0
    %1261 = vdwg.mxu0
    %1262 = vmatprep.subr.bf16.mxu0 0
    %1263 = vmatpush1.bf16.msra.mxu0 %v956
    %1264 = vmatprep.subr.bf16.mxu0 0
    %1265 = vmatpush1.bf16.msra.mxu0 %v957
    %1266 = vmatprep.subr.bf16.mxu0 0
    %1267 = vmatpush1.bf16.msra.mxu0 %v958
    %1268 = vmatprep.subr.bf16.mxu0 0
    %1269 = vmatpush1.bf16.msra.mxu0 %v959
    %1270 = vmatprep.subr.bf16.mxu0 0
    %1271 = vmatpush1.bf16.msra.mxu0 %v960
    %1272 = vmatprep.subr.bf16.mxu0 0
    %1273 = vmatpush1.bf16.msra.mxu0 %v961
    %1274 = vmatprep.subr.bf16.mxu0 0
    %1275 = vmatpush1.bf16.msra.mxu0 %v962
    %1276 = vmatprep.subr.bf16.mxu0 0
    %1277 = vmatpush1.bf16.msra.mxu0 %v963
    %1278 = vmatprep.subr.bf16.mxu0 0
    %1279 = vmatpush1.bf16.msra.mxu0 %v964
    %1280 = vmatprep.subr.bf16.mxu0 0
    %1281 = vmatpush1.bf16.msra.mxu0 %v965
    %1282 = vmatprep.subr.bf16.mxu0 0
    %1283 = vmatpush1.bf16.msra.mxu0 %v966
    %1284 = vmatprep.subr.bf16.mxu0 0
    %1285 = vmatpush1.bf16.msra.mxu0 %v967
    %1286 = vmatprep.subr.bf16.mxu0 0
    %1287 = vmatpush1.bf16.msra.mxu0 %v968
    %1288 = vmatprep.subr.bf16.mxu0 0
    %1289 = vmatpush1.bf16.msra.mxu0 %v969
    %1290 = vmatprep.subr.bf16.mxu0 0
    %1291 = vmatpush1.bf16.msra.mxu0 %v970
    %1292 = vmatprep.subr.bf16.mxu0 0
    %1293 = vmatpush1.bf16.msra.mxu0 %v971
    %1294 = vmatprep.mubr.bf16.mxu0 %v497
    %1295 = vmatmul.mubr.bf16.gmra.mrb[0].mxu0 %v496
    %v1296 = vpop.f32.mrb[0].mxu0
    %v1297 = vadd.f32 %v1200, %v1296
    %v1298 = vpop.f32.mrb[0].mxu0
    %v1299 = vpop.f32.mrb[0].mxu0
    %v1300 = vadd.f32 %v1203, %v1299
    %v1301 = vpop.f32.mrb[0].mxu0
    %1302 = vmatprep.mubr.bf16.mxu0 %v506
    %1303 = vmatmul.mubr.bf16.gmra.mrb[0].mxu0 %v505
    %v1304 = vpop.f32.mrb[0].mxu0
    %v1305 = vadd.f32 %v1208, %v1304
    %v1306 = vpop.f32.mrb[0].mxu0
    %v1307 = vpop.f32.mrb[0].mxu0
    %v1308 = vadd.f32 %v1211, %v1307
    %v1309 = vpop.f32.mrb[0].mxu0
    %1310 = vmatprep.mubr.bf16.mxu0 %v515
    %1311 = vmatmul.mubr.bf16.gmra.mrb[0].mxu0 %v514
    %v1312 = vpop.f32.mrb[0].mxu0
    %v1313 = vadd.f32 %v1216, %v1312
    %v1314 = vpop.f32.mrb[0].mxu0
    %v1315 = vpop.f32.mrb[0].mxu0
    %v1316 = vadd.f32 %v1219, %v1315
    %v1317 = vpop.f32.mrb[0].mxu0
    %1318 = vmatprep.mubr.bf16.mxu0 %v524
    %1319 = vmatmul.mubr.bf16.gmra.mrb[0].mxu0 %v523
    %v1320 = vpop.f32.mrb[0].mxu0
    %v1321 = vadd.f32 %v1224, %v1320
    %v1322 = vpop.f32.mrb[0].mxu0
    %v1323 = vpop.f32.mrb[0].mxu0
    %v1324 = vadd.f32 %v1227, %v1323
    %v1325 = vpop.f32.mrb[0].mxu0
    %1326 = vmatprep.mubr.bf16.mxu0 %v533
    %1327 = vmatmul.mubr.bf16.gmra.mrb[0].mxu0 %v532
    %v1328 = vpop.f32.mrb[0].mxu0
    %v1329 = vadd.f32 %v1232, %v1328
    %v1330 = vpop.f32.mrb[0].mxu0
    %v1331 = vpop.f32.mrb[0].mxu0
    %v1332 = vadd.f32 %v1235, %v1331
    %v1333 = vpop.f32.mrb[0].mxu0
    %1334 = vmatprep.mubr.bf16.mxu0 %v542
    %1335 = vmatmul.mubr.bf16.gmra.mrb[0].mxu0 %v541
    %v1336 = vpop.f32.mrb[0].mxu0
    %v1337 = vadd.f32 %v1240, %v1336
    %v1338 = vpop.f32.mrb[0].mxu0
    %v1339 = vpop.f32.mrb[0].mxu0
    %v1340 = vadd.f32 %v1243, %v1339
    %v1341 = vpop.f32.mrb[0].mxu0
    %1342 = vmatprep.mubr.bf16.mxu0 %v551
    %1343 = vmatmul.mubr.bf16.gmra.mrb[0].mxu0 %v550
    %v1344 = vpop.f32.mrb[0].mxu0
    %v1345 = vadd.f32 %v1248, %v1344
    %v1346 = vpop.f32.mrb[0].mxu0
    %v1347 = vpop.f32.mrb[0].mxu0
    %v1348 = vadd.f32 %v1251, %v1347
    %v1349 = vpop.f32.mrb[0].mxu0
    %1350 = vmatprep.mubr.bf16.mxu0 %v560
    %1351 = vmatmul.mubr.bf16.gmra.mrb[0].mxu0 %v559
    %v1352 = vpop.f32.mrb[0].mxu0
    %v1353 = vadd.f32 %v1256, %v1352
    %v1354 = vpop.f32.mrb[0].mxu0
    %v1355 = vpop.f32.mrb[0].mxu0
    %v1356 = vadd.f32 %v1259, %v1355
    %v1357 = vpop.f32.mrb[0].mxu0
    %1358 = vdwg.mxu0
    %1359 = vmatprep.subr.bf16.mxu0 0
    %1360 = vmatpush1.bf16.msra.mxu0 %v972
    %1361 = vmatprep.subr.bf16.mxu0 0
    %1362 = vmatpush1.bf16.msra.mxu0 %v973
    %1363 = vmatprep.subr.bf16.mxu0 0
    %1364 = vmatpush1.bf16.msra.mxu0 %v974
    %1365 = vmatprep.subr.bf16.mxu0 0
    %1366 = vmatpush1.bf16.msra.mxu0 %v975
    %1367 = vmatprep.subr.bf16.mxu0 0
    %1368 = vmatpush1.bf16.msra.mxu0 %v976
    %1369 = vmatprep.subr.bf16.mxu0 0
    %1370 = vmatpush1.bf16.msra.mxu0 %v977
    %1371 = vmatprep.subr.bf16.mxu0 0
    %1372 = vmatpush1.bf16.msra.mxu0 %v978
    %1373 = vmatprep.subr.bf16.mxu0 0
    %1374 = vmatpush1.bf16.msra.mxu0 %v979
    %1375 = vmatprep.subr.bf16.mxu0 0
    %1376 = vmatpush1.bf16.msra.mxu0 %v980
    %1377 = vmatprep.subr.bf16.mxu0 0
    %1378 = vmatpush1.bf16.msra.mxu0 %v981
    %1379 = vmatprep.subr.bf16.mxu0 0
    %1380 = vmatpush1.bf16.msra.mxu0 %v982
    %1381 = vmatprep.subr.bf16.mxu0 0
    %1382 = vmatpush1.bf16.msra.mxu0 %v983
    %1383 = vmatprep.subr.bf16.mxu0 0
    %1384 = vmatpush1.bf16.msra.mxu0 %v984
    %1385 = vmatprep.subr.bf16.mxu0 0
    %1386 = vmatpush1.bf16.msra.mxu0 %v985
    %1387 = vmatprep.subr.bf16.mxu0 0
    %1388 = vmatpush1.bf16.msra.mxu0 %v986
    %1389 = vmatprep.subr.bf16.mxu0 0
    %1390 = vmatpush1.bf16.msra.mxu0 %v987
    %1391 = vmatprep.mubr.bf16.mxu0 %v499
    %1392 = vmatmul.mubr.bf16.gmra.mrb[0].mxu0 %v498
    %v1393 = vpop.f32.mrb[0].mxu0
    %v1394 = vadd.f32 %v1297, %v1393
    %v1395 = vpop.f32.mrb[0].mxu0
    %v1396 = vpop.f32.mrb[0].mxu0
    %v1397 = vadd.f32 %v1300, %v1396
    %v1398 = vpop.f32.mrb[0].mxu0
    %1399 = vmatprep.mubr.bf16.mxu0 %v508
    %1400 = vmatmul.mubr.bf16.gmra.mrb[0].mxu0 %v507
    %v1401 = vpop.f32.mrb[0].mxu0
    %v1402 = vadd.f32 %v1305, %v1401
    %v1403 = vpop.f32.mrb[0].mxu0
    %v1404 = vpop.f32.mrb[0].mxu0
    %v1405 = vadd.f32 %v1308, %v1404
    %v1406 = vpop.f32.mrb[0].mxu0
    %1407 = vmatprep.mubr.bf16.mxu0 %v517
    %1408 = vmatmul.mubr.bf16.gmra.mrb[0].mxu0 %v516
    %v1409 = vpop.f32.mrb[0].mxu0
    %v1410 = vadd.f32 %v1313, %v1409
    %v1411 = vpop.f32.mrb[0].mxu0
    %v1412 = vpop.f32.mrb[0].mxu0
    %v1413 = vadd.f32 %v1316, %v1412
    %v1414 = vpop.f32.mrb[0].mxu0
    %1415 = vmatprep.mubr.bf16.mxu0 %v526
    %1416 = vmatmul.mubr.bf16.gmra.mrb[0].mxu0 %v525
    %v1417 = vpop.f32.mrb[0].mxu0
    %v1418 = vadd.f32 %v1321, %v1417
    %v1419 = vpop.f32.mrb[0].mxu0
    %v1420 = vpop.f32.mrb[0].mxu0
    %v1421 = vadd.f32 %v1324, %v1420
    %v1422 = vpop.f32.mrb[0].mxu0
    %1423 = vmatprep.mubr.bf16.mxu0 %v535
    %1424 = vmatmul.mubr.bf16.gmra.mrb[0].mxu0 %v534
    %v1425 = vpop.f32.mrb[0].mxu0
    %v1426 = vadd.f32 %v1329, %v1425
    %v1427 = vpop.f32.mrb[0].mxu0
    %v1428 = vpop.f32.mrb[0].mxu0
    %v1429 = vadd.f32 %v1332, %v1428
    %v1430 = vpop.f32.mrb[0].mxu0
    %1431 = vmatprep.mubr.bf16.mxu0 %v544
    %1432 = vmatmul.mubr.bf16.gmra.mrb[0].mxu0 %v543
    %v1433 = vpop.f32.mrb[0].mxu0
    %v1434 = vadd.f32 %v1337, %v1433
    %v1435 = vpop.f32.mrb[0].mxu0
    %v1436 = vpop.f32.mrb[0].mxu0
    %v1437 = vadd.f32 %v1340, %v1436
    %v1438 = vpop.f32.mrb[0].mxu0
    %1439 = vmatprep.mubr.bf16.mxu0 %v553
    %1440 = vmatmul.mubr.bf16.gmra.mrb[0].mxu0 %v552
    %v1441 = vpop.f32.mrb[0].mxu0
    %v1442 = vadd.f32 %v1345, %v1441
    %v1443 = vpop.f32.mrb[0].mxu0
    %v1444 = vpop.f32.mrb[0].mxu0
    %v1445 = vadd.f32 %v1348, %v1444
    %v1446 = vpop.f32.mrb[0].mxu0
    %1447 = vmatprep.mubr.bf16.mxu0 %v562
    %1448 = vmatmul.mubr.bf16.gmra.mrb[0].mxu0 %v561
    %v1449 = vpop.f32.mrb[0].mxu0
    %v1450 = vadd.f32 %v1353, %v1449
    %v1451 = vpop.f32.mrb[0].mxu0
    %v1452 = vpop.f32.mrb[0].mxu0
    %v1453 = vadd.f32 %v1356, %v1452
    %v1454 = vpop.f32.mrb[0].mxu0
    %1455 = vdwg.mxu0
    %1456 = vmatprep.subr.bf16.mxu0 0
    %1457 = vmatpush1.bf16.msra.mxu0 %v988
    %1458 = vmatprep.subr.bf16.mxu0 0
    %1459 = vmatpush1.bf16.msra.mxu0 %v989
    %1460 = vmatprep.subr.bf16.mxu0 0
    %1461 = vmatpush1.bf16.msra.mxu0 %v990
    %1462 = vmatprep.subr.bf16.mxu0 0
    %1463 = vmatpush1.bf16.msra.mxu0 %v991
    %1464 = vmatprep.subr.bf16.mxu0 0
    %1465 = vmatpush1.bf16.msra.mxu0 %v992
    %1466 = vmatprep.subr.bf16.mxu0 0
    %1467 = vmatpush1.bf16.msra.mxu0 %v993
    %1468 = vmatprep.subr.bf16.mxu0 0
    %1469 = vmatpush1.bf16.msra.mxu0 %v994
    %1470 = vmatprep.subr.bf16.mxu0 0
    %1471 = vmatpush1.bf16.msra.mxu0 %v995
    %1472 = vmatprep.subr.bf16.mxu0 0
    %1473 = vmatpush1.bf16.msra.mxu0 0
    %1474 = vmatprep.subr.bf16.mxu0 0
    %1475 = vmatpush1.bf16.msra.mxu0 0
    %1476 = vmatprep.subr.bf16.mxu0 0
    %1477 = vmatpush1.bf16.msra.mxu0 0
    %1478 = vmatprep.subr.bf16.mxu0 0
    %1479 = vmatpush1.bf16.msra.mxu0 0
    %1480 = vmatprep.subr.bf16.mxu0 0
    %1481 = vmatpush1.bf16.msra.mxu0 0
    %1482 = vmatprep.subr.bf16.mxu0 0
    %1483 = vmatpush1.bf16.msra.mxu0 0
    %1484 = vmatprep.subr.bf16.mxu0 0
    %1485 = vmatpush1.bf16.msra.mxu0 0
    %1486 = vmatprep.subr.bf16.mxu0 0
    %1487 = vmatpush1.bf16.msra.mxu0 0
    %1488 = vmatprep.mubr.bf16.mxu0 0
    %1489 = vmatmul.mubr.bf16.gmra.mrb[0].mxu0 %v500
    %v1490 = vpop.f32.mrb[0].mxu0
    %v1491 = vadd.f32 %v1394, %v1490
    %v1492 = vpop.f32.mrb[0].mxu0
    %v1493 = vpop.f32.mrb[0].mxu0
    %v1494 = vadd.f32 %v1397, %v1493
    %v1495 = vpop.f32.mrb[0].mxu0
    %1496 = vmatprep.mubr.bf16.mxu0 0
    %1497 = vmatmul.mubr.bf16.gmra.mrb[0].mxu0 %v509
    %v1498 = vpop.f32.mrb[0].mxu0
    %v1499 = vadd.f32 %v1402, %v1498
    %v1500 = vpop.f32.mrb[0].mxu0
    %v1501 = vpop.f32.mrb[0].mxu0
    %v1502 = vadd.f32 %v1405, %v1501
    %v1503 = vpop.f32.mrb[0].mxu0
    %1504 = vmatprep.mubr.bf16.mxu0 0
    %1505 = vmatmul.mubr.bf16.gmra.mrb[0].mxu0 %v518
    %v1506 = vpop.f32.mrb[0].mxu0
    %v1507 = vadd.f32 %v1410, %v1506
    %v1508 = vpop.f32.mrb[0].mxu0
    %v1509 = vpop.f32.mrb[0].mxu0
    %v1510 = vadd.f32 %v1413, %v1509
    %v1511 = vpop.f32.mrb[0].mxu0
    %1512 = vmatprep.mubr.bf16.mxu0 0
    %1513 = vmatmul.mubr.bf16.gmra.mrb[0].mxu0 %v527
    %v1514 = vpop.f32.mrb[0].mxu0
    %v1515 = vadd.f32 %v1418, %v1514
    %v1516 = vpop.f32.mrb[0].mxu0
    %v1517 = vpop.f32.mrb[0].mxu0
    %v1518 = vadd.f32 %v1421, %v1517
    %v1519 = vpop.f32.mrb[0].mxu0
    %1520 = vmatprep.mubr.bf16.mxu0 0
    %1521 = vmatmul.mubr.bf16.gmra.mrb[0].mxu0 %v536
    %v1522 = vpop.f32.mrb[0].mxu0
    %v1523 = vadd.f32 %v1426, %v1522
    %v1524 = vpop.f32.mrb[0].mxu0
    %v1525 = vpop.f32.mrb[0].mxu0
    %v1526 = vadd.f32 %v1429, %v1525
    %v1527 = vpop.f32.mrb[0].mxu0
    %1528 = vmatprep.mubr.bf16.mxu0 0
    %1529 = vmatmul.mubr.bf16.gmra.mrb[0].mxu0 %v545
    %v1530 = vpop.f32.mrb[0].mxu0
    %v1531 = vadd.f32 %v1434, %v1530
    %v1532 = vpop.f32.mrb[0].mxu0
    %v1533 = vpop.f32.mrb[0].mxu0
    %v1534 = vadd.f32 %v1437, %v1533
    %v1535 = vpop.f32.mrb[0].mxu0
    %1536 = vmatprep.mubr.bf16.mxu0 0
    %1537 = vmatmul.mubr.bf16.gmra.mrb[0].mxu0 %v554
    %v1538 = vpop.f32.mrb[0].mxu0
    %v1539 = vadd.f32 %v1442, %v1538
    %v1540 = vpop.f32.mrb[0].mxu0
    %v1541 = vpop.f32.mrb[0].mxu0
    %v1542 = vadd.f32 %v1445, %v1541
    %v1543 = vpop.f32.mrb[0].mxu0
    %1544 = vmatprep.mubr.bf16.mxu0 0
    %1545 = vmatmul.mubr.bf16.gmra.mrb[0].mxu0 %v563
    %v1546 = vpop.f32.mrb[0].mxu0
    %v1547 = vadd.f32 %v1450, %v1546
    %v1548 = vpop.f32.mrb[0].mxu0
    %v1549 = vpop.f32.mrb[0].mxu0
    %v1550 = vadd.f32 %v1453, %v1549
    %v1551 = vpop.f32.mrb[0].mxu0
    %1552 = vdwg.mxu0
    %1553 = vst [vmem:[#allocation7] sm:$0xff] %v1491
    %1554 = vst [vmem:[#allocation7 + $0x8] sm:$0xff] %v1494
    %1555 = vst [vmem:[#allocation7 + $0x10] sm:$0xff] %v1499
    %1556 = vst [vmem:[#allocation7 + $0x18] sm:$0xff] %v1502
    %1557 = vst [vmem:[#allocation7 + $0x20] sm:$0xff] %v1507
    %1558 = vst [vmem:[#allocation7 + $0x28] sm:$0xff] %v1510
    %1559 = vst [vmem:[#allocation7 + $0x30] sm:$0xff] %v1515
    %1560 = vst [vmem:[#allocation7 + $0x38] sm:$0xff] %v1518
    %1561 = vst [vmem:[#allocation7 + $0x40] sm:$0xff] %v1523
    %1562 = vst [vmem:[#allocation7 + $0x48] sm:$0xff] %v1526
    %1563 = vst [vmem:[#allocation7 + $0x50] sm:$0xff] %v1531
    %1564 = vst [vmem:[#allocation7 + $0x58] sm:$0xff] %v1534
    %1565 = vst [vmem:[#allocation7 + $0x60] sm:$0xff] %v1539
    %1566 = vst [vmem:[#allocation7 + $0x68] sm:$0xff] %v1542
    %1567 = vst [vmem:[#allocation7 + $0x70] sm:$0xff] %v1547
    %1568 = vst [vmem:[#allocation7 + $0x78] sm:$0xff] %v1550
    %v1569 = vadd.f32 %v1491, %v1494
    %v1570 = vadd.f32 %v1569, %v1499
    %v1571 = vadd.f32 %v1570, %v1502
    %v1572 = vadd.f32 %v1571, %v1507
    %v1573 = vadd.f32 %v1572, %v1510
    %v1574 = vadd.f32 %v1573, %v1515
    %v1575 = vadd.f32 %v1574, %v1518
    %v1576 = vadd.f32 %v1575, %v1523
    %v1577 = vadd.f32 %v1576, %v1526
    %v1578 = vadd.f32 %v1577, %v1531
    %v1579 = vadd.f32 %v1578, %v1534
    %v1580 = vadd.f32 %v1579, %v1539
    %v1581 = vadd.f32 %v1580, %v1542
    %v1582 = vadd.f32 %v1581, %v1547
    %v1583 = vadd.f32 %v1582, %v1550
    %v1584 = vrot.slane %v1583, 4
    %v1585 = vadd.f32 %v1583, %v1584
    %v1586 = vrot.slane %v1585, 2
    %v1587 = vadd.f32 %v1585, %v1586
    %v1588 = vrot.slane %v1587, 1
    %v1589 = vadd.f32 %v1587, %v1588
    %v1590 = vmul.f32 %v1491, %v1491
    %v1591 = vmul.f32 %v1494, %v1494
    %v1592 = vmul.f32 %v1499, %v1499
    %v1593 = vmul.f32 %v1502, %v1502
    %v1594 = vmul.f32 %v1507, %v1507
    %v1595 = vmul.f32 %v1510, %v1510
    %v1596 = vmul.f32 %v1515, %v1515
    %v1597 = vmul.f32 %v1518, %v1518
    %v1598 = vmul.f32 %v1523, %v1523
    %v1599 = vmul.f32 %v1526, %v1526
    %v1600 = vmul.f32 %v1531, %v1531
    %v1601 = vmul.f32 %v1534, %v1534
    %v1602 = vmul.f32 %v1539, %v1539
    %v1603 = vmul.f32 %v1542, %v1542
    %v1604 = vmul.f32 %v1547, %v1547
    %v1605 = vmul.f32 %v1550, %v1550
    %v1606 = vadd.f32 %v1590, %v1591
    %v1607 = vadd.f32 %v1606, %v1592
    %v1608 = vadd.f32 %v1607, %v1593
    %v1609 = vadd.f32 %v1608, %v1594
    %v1610 = vadd.f32 %v1609, %v1595
    %v1611 = vadd.f32 %v1610, %v1596
    %v1612 = vadd.f32 %v1611, %v1597
    %v1613 = vadd.f32 %v1612, %v1598
    %v1614 = vadd.f32 %v1613, %v1599
    %v1615 = vadd.f32 %v1614, %v1600
    %v1616 = vadd.f32 %v1615, %v1601
    %v1617 = vadd.f32 %v1616, %v1602
    %v1618 = vadd.f32 %v1617, %v1603
    %v1619 = vadd.f32 %v1618, %v1604
    %v1620 = vadd.f32 %v1619, %v1605
    %v1621 = vrot.slane %v1620, 4
    %v1622 = vadd.f32 %v1620, %v1621
    %v1623 = vrot.slane %v1622, 2
    %v1624 = vadd.f32 %v1622, %v1623
    %v1625 = vrot.slane %v1624, 1
    %v1626 = vadd.f32 %v1624, %v1625
    %vm1627 = vcmask 1040384
    %v1628 = vsel %vm1627, %v1589, %v1626
    %vm1629 = vcmask 1041408
    %v1630 = vsel %vm1629, %v1628, 0.0
    %p1631 = scmp.eq.s32.totalorder 0, 0
    // Predicated region
    $region18: #{tpu_custom_call.1} parent=1 // pred_check
      %p1632 = pneg %p1631
    $region19: #{tpu_custom_call.1} parent=1 // pred_check_branch
      %1634 = sbr.rel (%p1632) target = $region21
    $region20: #{tpu_custom_call.1} parent=1 // pred_region
      %1635 = vst [vmem:[#allocation8] sm:$0xff] %v1630
    $region21: #{tpu_custom_call.1} parent=1 // pred_fallthru
      _
    %p1636 = scmp.gt.s32.totalorder 0, 0
    // Predicated region
    $region22: #{tpu_custom_call.1} parent=1 // pred_check
      %p1637 = pneg %p1636
    $region23: #{tpu_custom_call.1} parent=1 // pred_check_branch
      %1639 = sbr.rel (%p1637) target = $region25
    $region24: #{tpu_custom_call.1} parent=1 // pred_region
      %v1640 = vld [vmem:[#allocation8] sm:$0xff]
      %v1641 = vadd.f32 %v1640, %v1630
      %1642 = vst [vmem:[#allocation8] sm:$0xff] %v1641
    $region25: #{tpu_custom_call.1} parent=1 // pred_fallthru
      _
    // Predicated region
    $region26: #{tpu_custom_call.1} parent=1 // pred_check
      _
    $region27: #{tpu_custom_call.1} parent=1 // pred_check_branch
      %1644 = sbr.rel (0) target = $region29
    $region28: #{tpu_custom_call.1} parent=1 // pred_region
      %s1646 = ssub.s32 2048, 2048
      %1647 = vsyncadd [#allocation4], %s1646
      %s1648 = sshll.u32 [#allocation7], 4
      %s1649 = int_to_ptr.vmem [resolvable:$true] %s1648
      %1654 = dma.vmem_to_hbm [thread:$0]  %s1649, 2048, %s2, [#allocation4], 128, 128, 8
    $region29: #{tpu_custom_call.1} parent=1 // pred_fallthru
      _
    // Predicated region
    $region30: #{tpu_custom_call.1} parent=1 // pred_check
      _
    $region31: #{tpu_custom_call.1} parent=1 // pred_check_branch
      %1656 = sbr.rel (0) target = $region33
    $region32: #{tpu_custom_call.1} parent=1 // pred_region
      %s1658 = ssub.s32 128, 128
      %1659 = vsyncadd [#allocation9], %s1658
      %s1661 = sshll.u32 [#allocation8], 4
      %s1662 = int_to_ptr.vmem [resolvable:$true] %s1661
      %1664 = dma.vmem_to_hbm [thread:$0]  %s1662, 128, %s3, [#allocation9]
    $region33: #{tpu_custom_call.1} parent=1 // pred_fallthru
      _
    // Predicated region
    $region34: #{tpu_custom_call.1} parent=1 // pred_check
      _
    $region35: #{tpu_custom_call.1} parent=1 // pred_check_branch
      %1666 = sbr.rel (0) target = $region37
    $region36: #{tpu_custom_call.1} parent=1 // pred_region
      %1667 = dma.done [#allocation4], 2048
    $region37: #{tpu_custom_call.1} parent=1 // pred_fallthru
      _
    // Predicated region
    $region38: #{tpu_custom_call.1} parent=1 // pred_check
      _
    $region39: #{tpu_custom_call.1} parent=1 // pred_check_branch
      %1669 = sbr.rel (0) target = $region41
    $region40: #{tpu_custom_call.1} parent=1 // pred_region
      %1670 = dma.done [#allocation9], 128
    $region41: #{tpu_custom_call.1} parent=1 // pred_fallthru
      _
    %1671 = vsyncpa [#allocation3], 1
    %1672 = vsyncpa [#allocation6], 1
    %1673 = vsyncpa [#allocation4], 1
    %1674 = vsyncpa [#allocation9], 1

</llo_original>
